<compile_context>
chip_gen: v7x
topology: tpu7x:2x2x1
jax: 0.10.0
libtpu: 0.0.40
codegen_flags: <defaults>
</compile_context>

<pallas_src>
import functools

import jax
import jax.numpy as jnp
from jax import lax
from jax.experimental import pallas as pl
from jax.experimental.pallas import tpu as pltpu

NEG_SLOPE = 0.01   # nn.LeakyReLU() default
BN_EPS = 1e-5      # nn.BatchNorm2d default


def _leaky(x):
    # max(x, a*x) == LeakyReLU(x) for 0 < a < 1 (mul + max, no select).
    return jnp.maximum(x, NEG_SLOPE * x)


def conv_layer_kernel(x_ref, w1_ref, w2_ref, w3_ref,
                      b1_ref, b2_ref, b3_ref, mask_ref,
                      o_ref, *, W):
    """Fused 1x1 -> 3x3(pad=1) -> 1x1 conv stack (BN folded, LeakyReLU between stages).

    Blocks: x (1, Cin, N), o (1, Cout, N) with N = images_per_step * H * W on the lane
    axis; weights / shifts / masks are full (constant-index) operands.
    """
    N = x_ref.shape[2]

    x = x_ref[0]                                                       # (Cin, N)

    # ---- stage 1: 1x1 conv (BN scale folded into weights) + shift + LeakyReLU ----
    y = jnp.dot(w1_ref[...], x, preferred_element_type=jnp.float32)    # (Cin, N)
    y = _leaky(y + b1_ref[...])

    # ---- stage 2: 3x3 conv, padding=1, as ONE K=9*Cin matmul ---------------------
    # Each tap (dy, dx) is a pure lane rotation of y by s = dy*W + dx.  The rotation is
    # only "wrong" at out-of-image / cross-image / wrapped positions, and exactly those
    # positions are zeroed by the precomputed border masks.  (Valid only for 3x3,
    # stride 1, pad 1 — asserted in the wrapper.)
    taps = []
    for dy in (-1, 0, 1):
        for dx in (-1, 0, 1):
            s = dy * W + dx
            taps.append(y if s == 0 else pltpu.roll(y, (-s) % N, axis=1))
    # (9*Cin, N) built in registers; mask_ref has each of the 9 border-mask rows
    # pre-repeated Cin times, so one lane-dense multiply applies all masks at once.
    im2col = jnp.concatenate(taps, axis=0) * mask_ref[...]
    z = jnp.dot(w2_ref[...], im2col, preferred_element_type=jnp.float32)  # (Cout, N)
    z = _leaky(z + b2_ref[...])

    # ---- stage 3: 1x1 conv + shift + LeakyReLU ------------------------------------
    u = jnp.dot(w3_ref[...], z, preferred_element_type=jnp.float32)    # (Cout, N)
    o_ref[0] = _leaky(u + b3_ref[...])


def _fold_bn(gamma, beta, mean, var):
    scale = gamma / jnp.sqrt(var + BN_EPS)
    shift = beta - mean * scale
    return scale.astype(jnp.float32), shift.astype(jnp.float32)


def _border_masks(H, W):
    """(9, H*W) float32; row k=(dy+1)*3+(dx+1) is 1 where (h+dy, w+dx) is inside the image."""
    h = jnp.arange(H).reshape(H, 1)
    w = jnp.arange(W).reshape(1, W)
    rows = []
    for dy in (-1, 0, 1):
        for dx in (-1, 0, 1):
            valid = (h + dy >= 0) & (h + dy < H) & (w + dx >= 0) & (w + dx < W)
            rows.append(valid.reshape(H * W))
    return jnp.stack(rows, axis=0).astype(jnp.float32)


def _default_batch_chunks(B):
    """1 chunk (widest lanes, least per-grid-step overhead) on single-TC chips
    (v5e/v6e); 2 parallel chunks on 2-TensorCore chips (v4/v5p/v7x)."""
    try:
        kind = jax.devices()[0].device_kind.lower()
    except Exception:
        kind = ""
    two_tc = any(t in kind for t in ("v7", "7x", "v4", "v5p"))
    return 2 if (two_tc and B % 2 == 0) else 1


def convolution_layer(x_nchw, w1, w2, w3, bn1, bn2, bn3, *, batch_chunks=None):
    """x_nchw: (B, Cin, H, W) float32. Conv weights in PyTorch OIHW layout, bias-free."""
    B, Cin, H, W = x_nchw.shape
    Cout = w2.shape[0]
    HW = H * W

    # The lane-rotation + border-mask trick assumes exactly 3x3 / stride 1 / pad 1
    # (and 1x1 for the other two convs).
    assert w1.shape[2:] == (1, 1) and w3.shape[2:] == (1, 1) and w2.shape[2:] == (3, 3)

    if batch_chunks is None:
        batch_chunks = _default_batch_chunks(B)
    if B % batch_chunks != 0:
        batch_chunks = 1
    cb = B // batch_chunks          # images folded into the lane axis per grid step
    N = cb * HW                     # lane width per step (multiple of 128)

    # Fold the per-chunk batch into the lane axis: (chunks, Cin, cb*HW).
    x_f = (x_nchw.astype(jnp.float32)
           .reshape(batch_chunks, cb, Cin, HW)
           .transpose(0, 2, 1, 3)
           .reshape(batch_chunks, Cin, N))

    s1, t1 = _fold_bn(*bn1)
    s2, t2 = _fold_bn(*bn2)
    s3, t3 = _fold_bn(*bn3)

    # Fold BN scale into the conv weights (per output channel / row).
    w1_f = w1[:, :, 0, 0].astype(jnp.float32) * s1[:, None]                        # (Cin, Cin)
    w2_f = (jnp.transpose(w2, (0, 2, 3, 1)).reshape(Cout, 9 * Cin).astype(jnp.float32)
            * s2[:, None])                                                          # (Cout, 9*Cin)
    w3_f = w3[:, :, 0, 0].astype(jnp.float32) * s3[:, None]                         # (Cout, Cout)

    b1c = t1.reshape(Cin, 1)
    b2c = t2.reshape(Cout, 1)
    b3c = t3.reshape(Cout, 1)

    # (9, HW) border masks -> tiled across the folded images -> each row repeated Cin
    # times so a single multiply masks the whole (9*Cin, N) im2col block in the kernel.
    mask36 = jnp.repeat(jnp.tile(_border_masks(H, W), (1, cb)), Cin, axis=0)        # (9*Cin, N)

    kernel = functools.partial(conv_layer_kernel, W=W)
    consts = [w1_f, w2_f, w3_f, b1c, b2c, b3c, mask36]

    def const_spec(shape, single_buffer):
        ndim = len(shape)
        idx = lambda c: (0,) * ndim
        if single_buffer:
            # Constant index_map => double-buffering only doubles resident VMEM.
            return pl.BlockSpec(shape, idx, pipeline_mode=pl.Buffered(1))
        return pl.BlockSpec(shape, idx)

    def call(single_buffer_consts):
        return pl.pallas_call(
            kernel,
            out_shape=jax.ShapeDtypeStruct((batch_chunks, Cout, N), jnp.float32),
            grid_spec=pltpu.PrefetchScalarGridSpec(
                num_scalar_prefetch=0,
                grid=(batch_chunks,),
                in_specs=[pl.BlockSpec((1, Cin, N), lambda c: (c, 0, 0))]
                         + [const_spec(a.shape, single_buffer_consts) for a in consts],
                out_specs=pl.BlockSpec((1, Cout, N), lambda c: (c, 0, 0)),
            ),
            compiler_params=pltpu.CompilerParams(dimension_semantics=("parallel",)),
        )(x_f, *consts)

    # NOTE(v7x): for production H/W/C, tile the folded lane axis (keep it a multiple of
    # 128, ideally >= 512) and budget VMEM explicitly with
    # pltpu.CompilerParams(vmem_limit_bytes=...); at these sizes everything fits.
    try:
        out = call(True)            # single-buffered constant operands (pl.Buffered(1))
    except Exception:
        out = call(False)           # fallback for JAX versions without pipeline_mode

    # Un-fold the lane axis back to (B, Cout, H, W).
    return (out.reshape(batch_chunks, Cout, cb, HW)
               .transpose(0, 2, 1, 3)
               .reshape(B, Cout, H, W))


def reference_forward(x, w1, w2, w3, bn1, bn2, bn3):
    """Pure-JAX NCHW reference matching the PyTorch module (eval-mode BN)."""
    def bn(x, p):
        g, b, m, v = p
        inv = g / jnp.sqrt(v + BN_EPS)
        return (x - m[None, :, None, None]) * inv[None, :, None, None] + b[None, :, None, None]

    def conv(x, w, pad):
        return lax.conv_general_dilated(
            x, w, window_strides=(1, 1), padding=[(pad, pad), (pad, pad)],
            dimension_numbers=("NCHW", "OIHW", "NCHW"))

    y = _leaky(bn(conv(x, w1, 0), bn1))
    y = _leaky(bn(conv(y, w2, 1), bn2))
    y = _leaky(bn(conv(y, w3, 0), bn3))
    return y


if __name__ == "__main__":
    B, Cin, Cout, H, W = 2, 4, 8, 16, 16

    key = jax.random.PRNGKey(0)
    ks = jax.random.split(key, 12)

    x = jax.random.normal(ks[0], (B, Cin, H, W), dtype=jnp.float32)

    # Conv weights (PyTorch OIHW, bias=False).
    w1 = jax.random.normal(ks[1], (Cin, Cin, 1, 1), dtype=jnp.float32) * 0.3
    w2 = jax.random.normal(ks[2], (Cout, Cin, 3, 3), dtype=jnp.float32) * 0.1
    w3 = jax.random.normal(ks[3], (Cout, Cout, 1, 1), dtype=jnp.float32) * 0.3

    # BatchNorm params (gamma, beta, running_mean, running_var) — non-trivial values.
    def bn_params(kg, kb, km, kv, c):
        gamma = 1.0 + 0.1 * jax.random.normal(kg, (c,), dtype=jnp.float32)
        beta = 0.1 * jax.random.normal(kb, (c,), dtype=jnp.float32)
        mean = 0.1 * jax.random.normal(km, (c,), dtype=jnp.float32)
        var = 1.0 + 0.1 * jax.random.uniform(kv, (c,), dtype=jnp.float32)
        return gamma, beta, mean, var

    bn1 = bn_params(ks[4], ks[5], ks[6], ks[7], Cin)
    bn2 = bn_params(ks[8], ks[9], ks[10], ks[11], Cout)
    bn3 = bn_params(ks[7], ks[6], ks[5], ks[4], Cout)

    ref = reference_forward(x, w1, w2, w3, bn1, bn2, bn3)

    # Default (device-dependent) chunking.
    out = jax.block_until_ready(convolution_layer(x, w1, w2, w3, bn1, bn2, bn3))
    assert out.shape == (B, Cout, H, W), out.shape
    assert jnp.allclose(out, ref, atol=1e-4, rtol=1e-4), \
        f"max abs err {float(jnp.max(jnp.abs(out - ref)))}"

    # Validate the batch->lane folding for both chunkings regardless of the chip we got.
    for chunks in (1, 2):
        o = jax.block_until_ready(
            convolution_layer(x, w1, w2, w3, bn1, bn2, bn3, batch_chunks=chunks))
        assert jnp.allclose(o, ref, atol=1e-4, rtol=1e-4), \
            f"chunks={chunks}: max abs err {float(jnp.max(jnp.abs(o - ref)))}"

    print("KERNEL_OK")
</pallas_src>

<mosaic_0001>
module attributes {stable_mosaic.version = 11 : i64} {
  func.func @conv_layer_kernel(%arg0: i32, %arg1: memref<1x4x512xf32, #tpu.memory_space<vmem>>, %arg2: memref<4x4xf32, #tpu.memory_space<vmem>>, %arg3: memref<8x36xf32, #tpu.memory_space<vmem>>, %arg4: memref<8x8xf32, #tpu.memory_space<vmem>>, %arg5: memref<4x1xf32, #tpu.memory_space<vmem>>, %arg6: memref<8x1xf32, #tpu.memory_space<vmem>>, %arg7: memref<8x1xf32, #tpu.memory_space<vmem>>, %arg8: memref<36x512xf32, #tpu.memory_space<vmem>>, %arg9: memref<1x8x512xf32, #tpu.memory_space<vmem>>) attributes {dimension_semantics = [#tpu.dimension_semantics<parallel>], iteration_bounds = array<i64: 1>, scalar_prefetch = 0 : i64, scratch_operands = 0 : i64, tpu.core_type = #tpu.core_type<tc>, window_params = [{transform_indices = @transform_0, window_bounds = array<i64: 1, 4, 512>}, {pipeline_mode = #tpu.pipeline_mode<synchronous>, transform_indices = @transform_1, window_bounds = array<i64: 4, 4>}, {pipeline_mode = #tpu.pipeline_mode<synchronous>, transform_indices = @transform_2, window_bounds = array<i64: 8, 36>}, {pipeline_mode = #tpu.pipeline_mode<synchronous>, transform_indices = @transform_3, window_bounds = array<i64: 8, 8>}, {pipeline_mode = #tpu.pipeline_mode<synchronous>, transform_indices = @transform_4, window_bounds = array<i64: 4, 1>}, {pipeline_mode = #tpu.pipeline_mode<synchronous>, transform_indices = @transform_5, window_bounds = array<i64: 8, 1>}, {pipeline_mode = #tpu.pipeline_mode<synchronous>, transform_indices = @transform_6, window_bounds = array<i64: 8, 1>}, {pipeline_mode = #tpu.pipeline_mode<synchronous>, transform_indices = @transform_7, window_bounds = array<i64: 36, 512>}, {transform_indices = @transform_8, window_bounds = array<i64: 1, 8, 512>}]} {
    %c0 = arith.constant 0 : index
    %c0_0 = arith.constant 0 : index
    %c0_1 = arith.constant 0 : index
    %0 = vector.load %arg1[%c0, %c0_0, %c0_1] : memref<1x4x512xf32, #tpu.memory_space<vmem>>, vector<1x4x512xf32>
    %1 = vector.shape_cast %0 : vector<1x4x512xf32> to vector<4x512xf32>
    %c0_2 = arith.constant 0 : index
    %c0_3 = arith.constant 0 : index
    %2 = vector.load %arg2[%c0_2, %c0_3] : memref<4x4xf32, #tpu.memory_space<vmem>>, vector<4x4xf32>
    %cst = arith.constant dense<0.000000e+00> : vector<4x512xf32>
    %3 = tpu.matmul %2, %1, %cst {dimension_numbers = #tpu.dot_dimension_numbers<[1], [0], [0], [1], [0, 0, 1, 1], [], []>} : vector<4x4xf32>, vector<4x512xf32>, vector<4x512xf32> -> vector<4x512xf32>
    %c0_4 = arith.constant 0 : index
    %c0_5 = arith.constant 0 : index
    %4 = vector.load %arg5[%c0_4, %c0_5] : memref<4x1xf32, #tpu.memory_space<vmem>>, vector<4x1xf32>
    %5 = vector.broadcast %4 : vector<4x1xf32> to vector<4x512xf32>
    %6 = arith.addf %3, %5 : vector<4x512xf32>
    %cst_6 = arith.constant 0.00999999977 : f32
    %7 = vector.broadcast %cst_6 : f32 to vector<4x512xf32>
    %8 = arith.mulf %7, %6 : vector<4x512xf32>
    %9 = arith.maximumf %6, %8 : vector<4x512xf32>
    %c17_i32 = arith.constant 17 : i32
    %10 = tpu.dynamic_rotate %9 by %c17_i32 dim 1 : vector<4x512xf32>, i32 -> vector<4x512xf32>
    %c16_i32 = arith.constant 16 : i32
    %11 = tpu.dynamic_rotate %9 by %c16_i32 dim 1 : vector<4x512xf32>, i32 -> vector<4x512xf32>
    %c15_i32 = arith.constant 15 : i32
    %12 = tpu.dynamic_rotate %9 by %c15_i32 dim 1 : vector<4x512xf32>, i32 -> vector<4x512xf32>
    %c1_i32 = arith.constant 1 : i32
    %13 = tpu.dynamic_rotate %9 by %c1_i32 dim 1 : vector<4x512xf32>, i32 -> vector<4x512xf32>
    %c511_i32 = arith.constant 511 : i32
    %14 = tpu.dynamic_rotate %9 by %c511_i32 dim 1 : vector<4x512xf32>, i32 -> vector<4x512xf32>
    %c497_i32 = arith.constant 497 : i32
    %15 = tpu.dynamic_rotate %9 by %c497_i32 dim 1 : vector<4x512xf32>, i32 -> vector<4x512xf32>
    %c496_i32 = arith.constant 496 : i32
    %16 = tpu.dynamic_rotate %9 by %c496_i32 dim 1 : vector<4x512xf32>, i32 -> vector<4x512xf32>
    %c495_i32 = arith.constant 495 : i32
    %17 = tpu.dynamic_rotate %9 by %c495_i32 dim 1 : vector<4x512xf32>, i32 -> vector<4x512xf32>
    %18 = tpu.concatenate %10, %11, %12, %13, %9, %14, %15, %16, %17 in 0 : vector<4x512xf32>, vector<4x512xf32>, vector<4x512xf32>, vector<4x512xf32>, vector<4x512xf32>, vector<4x512xf32>, vector<4x512xf32>, vector<4x512xf32>, vector<4x512xf32> -> vector<36x512xf32>
    %c0_7 = arith.constant 0 : index
    %c0_8 = arith.constant 0 : index
    %19 = vector.load %arg8[%c0_7, %c0_8] : memref<36x512xf32, #tpu.memory_space<vmem>>, vector<36x512xf32>
    %20 = arith.mulf %18, %19 : vector<36x512xf32>
    %c0_9 = arith.constant 0 : index
    %c0_10 = arith.constant 0 : index
    %21 = vector.load %arg3[%c0_9, %c0_10] : memref<8x36xf32, #tpu.memory_space<vmem>>, vector<8x36xf32>
    %cst_11 = arith.constant dense<0.000000e+00> : vector<8x512xf32>
    %22 = tpu.matmul %21, %20, %cst_11 {dimension_numbers = #tpu.dot_dimension_numbers<[1], [0], [0], [1], [0, 0, 1, 1], [], []>} : vector<8x36xf32>, vector<36x512xf32>, vector<8x512xf32> -> vector<8x512xf32>
    %c0_12 = arith.constant 0 : index
    %c0_13 = arith.constant 0 : index
    %23 = vector.load %arg6[%c0_12, %c0_13] : memref<8x1xf32, #tpu.memory_space<vmem>>, vector<8x1xf32>
    %24 = vector.broadcast %23 : vector<8x1xf32> to vector<8x512xf32>
    %25 = arith.addf %22, %24 : vector<8x512xf32>
    %cst_14 = arith.constant 0.00999999977 : f32
    %26 = vector.broadcast %cst_14 : f32 to vector<8x512xf32>
    %27 = arith.mulf %26, %25 : vector<8x512xf32>
    %28 = arith.maximumf %25, %27 : vector<8x512xf32>
    %c0_15 = arith.constant 0 : index
    %c0_16 = arith.constant 0 : index
    %29 = vector.load %arg4[%c0_15, %c0_16] : memref<8x8xf32, #tpu.memory_space<vmem>>, vector<8x8xf32>
    %cst_17 = arith.constant dense<0.000000e+00> : vector<8x512xf32>
    %30 = tpu.matmul %29, %28, %cst_17 {dimension_numbers = #tpu.dot_dimension_numbers<[1], [0], [0], [1], [0, 0, 1, 1], [], []>} : vector<8x8xf32>, vector<8x512xf32>, vector<8x512xf32> -> vector<8x512xf32>
    %c0_18 = arith.constant 0 : index
    %c0_19 = arith.constant 0 : index
    %31 = vector.load %arg7[%c0_18, %c0_19] : memref<8x1xf32, #tpu.memory_space<vmem>>, vector<8x1xf32>
    %32 = vector.broadcast %31 : vector<8x1xf32> to vector<8x512xf32>
    %33 = arith.addf %30, %32 : vector<8x512xf32>
    %cst_20 = arith.constant 0.00999999977 : f32
    %34 = vector.broadcast %cst_20 : f32 to vector<8x512xf32>
    %35 = arith.mulf %34, %33 : vector<8x512xf32>
    %36 = arith.maximumf %33, %35 : vector<8x512xf32>
    %c0_21 = arith.constant 0 : index
    %c0_22 = arith.constant 0 : index
    %c0_23 = arith.constant 0 : index
    %37 = vector.load %arg9[%c0_21, %c0_22, %c0_23] : memref<1x8x512xf32, #tpu.memory_space<vmem>>, vector<1x8x512xf32>
    %38 = vector.shape_cast %37 : vector<1x8x512xf32> to vector<8x512xf32>
    %39 = vector.shape_cast %36 : vector<8x512xf32> to vector<1x8x512xf32>
    tpu.vector_store %arg9[%c0_21, %c0_22, %c0_23], %39 {strides = array<i32>} : memref<1x8x512xf32, #tpu.memory_space<vmem>>, vector<1x8x512xf32>,
    return
  }
  func.func @transform_0(%arg0: i32) -> (i32, i32, i32) {
    %c0_i32 = arith.constant 0 : i32
    %c0_i32_0 = arith.constant 0 : i32
    %c0_i32_1 = arith.constant 0 : i32
    return %arg0, %c0_i32, %c0_i32_0 : i32, i32, i32
  }
  func.func @transform_1(%arg0: i32) -> (i32, i32) {
    %c0_i32 = arith.constant 0 : i32
    %c0_i32_0 = arith.constant 0 : i32
    %c0_i32_1 = arith.constant 0 : i32
    return %c0_i32, %c0_i32_0 : i32, i32
  }
  func.func @transform_2(%arg0: i32) -> (i32, i32) {
    %c0_i32 = arith.constant 0 : i32
    %c0_i32_0 = arith.constant 0 : i32
    %c0_i32_1 = arith.constant 0 : i32
    return %c0_i32, %c0_i32_0 : i32, i32
  }
  func.func @transform_3(%arg0: i32) -> (i32, i32) {
    %c0_i32 = arith.constant 0 : i32
    %c0_i32_0 = arith.constant 0 : i32
    %c0_i32_1 = arith.constant 0 : i32
    return %c0_i32, %c0_i32_0 : i32, i32
  }
  func.func @transform_4(%arg0: i32) -> (i32, i32) {
    %c0_i32 = arith.constant 0 : i32
    %c0_i32_0 = arith.constant 0 : i32
    %c0_i32_1 = arith.constant 0 : i32
    return %c0_i32, %c0_i32_0 : i32, i32
  }
  func.func @transform_5(%arg0: i32) -> (i32, i32) {
    %c0_i32 = arith.constant 0 : i32
    %c0_i32_0 = arith.constant 0 : i32
    %c0_i32_1 = arith.constant 0 : i32
    return %c0_i32, %c0_i32_0 : i32, i32
  }
  func.func @transform_6(%arg0: i32) -> (i32, i32) {
    %c0_i32 = arith.constant 0 : i32
    %c0_i32_0 = arith.constant 0 : i32
    %c0_i32_1 = arith.constant 0 : i32
    return %c0_i32, %c0_i32_0 : i32, i32
  }
  func.func @transform_7(%arg0: i32) -> (i32, i32) {
    %c0_i32 = arith.constant 0 : i32
    %c0_i32_0 = arith.constant 0 : i32
    %c0_i32_1 = arith.constant 0 : i32
    return %c0_i32, %c0_i32_0 : i32, i32
  }
  func.func @transform_8(%arg0: i32) -> (i32, i32, i32) {
    %c0_i32 = arith.constant 0 : i32
    %c0_i32_0 = arith.constant 0 : i32
    %c0_i32_1 = arith.constant 0 : i32
    return %arg0, %c0_i32, %c0_i32_0 : i32, i32, i32
  }
}

module attributes {stable_mosaic.version = 11 : i64} {
  func.func @conv_layer_kernel(%arg0: i32, %arg1: memref<1x4x512xf32, #tpu.memory_space<vmem>>, %arg2: memref<4x4xf32, #tpu.memory_space<vmem>>, %arg3: memref<8x36xf32, #tpu.memory_space<vmem>>, %arg4: memref<8x8xf32, #tpu.memory_space<vmem>>, %arg5: memref<4x1xf32, #tpu.memory_space<vmem>>, %arg6: memref<8x1xf32, #tpu.memory_space<vmem>>, %arg7: memref<8x1xf32, #tpu.memory_space<vmem>>, %arg8: memref<36x512xf32, #tpu.memory_space<vmem>>, %arg9: memref<1x8x512xf32, #tpu.memory_space<vmem>>) attributes {dimension_semantics = [#tpu.dimension_semantics<parallel>], iteration_bounds = array<i64: 1>, scalar_prefetch = 0 : i64, scratch_operands = 0 : i64, tpu.core_type = #tpu.core_type<tc>, window_params = [{transform_indices = @transform_0, window_bounds = array<i64: 1, 4, 512>}, {pipeline_mode = #tpu.pipeline_mode<synchronous>, transform_indices = @transform_1, window_bounds = array<i64: 4, 4>}, {pipeline_mode = #tpu.pipeline_mode<synchronous>, transform_indices = @transform_2, window_bounds = array<i64: 8, 36>}, {pipeline_mode = #tpu.pipeline_mode<synchronous>, transform_indices = @transform_3, window_bounds = array<i64: 8, 8>}, {pipeline_mode = #tpu.pipeline_mode<synchronous>, transform_indices = @transform_4, window_bounds = array<i64: 4, 1>}, {pipeline_mode = #tpu.pipeline_mode<synchronous>, transform_indices = @transform_5, window_bounds = array<i64: 8, 1>}, {pipeline_mode = #tpu.pipeline_mode<synchronous>, transform_indices = @transform_6, window_bounds = array<i64: 8, 1>}, {pipeline_mode = #tpu.pipeline_mode<synchronous>, transform_indices = @transform_7, window_bounds = array<i64: 36, 512>}, {transform_indices = @transform_8, window_bounds = array<i64: 1, 8, 512>}]} {
    %c0 = arith.constant 0 : index
    %c0_0 = arith.constant 0 : index
    %c0_1 = arith.constant 0 : index
    %0 = vector.load %arg1[%c0, %c0_0, %c0_1] : memref<1x4x512xf32, #tpu.memory_space<vmem>>, vector<1x4x512xf32>
    %1 = vector.shape_cast %0 : vector<1x4x512xf32> to vector<4x512xf32>
    %c0_2 = arith.constant 0 : index
    %c0_3 = arith.constant 0 : index
    %2 = vector.load %arg2[%c0_2, %c0_3] : memref<4x4xf32, #tpu.memory_space<vmem>>, vector<4x4xf32>
    %cst = arith.constant dense<0.000000e+00> : vector<4x512xf32>
    %3 = tpu.matmul %2, %1, %cst {dimension_numbers = #tpu.dot_dimension_numbers<[1], [0], [0], [1], [0, 0, 1, 1], [], []>} : vector<4x4xf32>, vector<4x512xf32>, vector<4x512xf32> -> vector<4x512xf32>
    %c0_4 = arith.constant 0 : index
    %c0_5 = arith.constant 0 : index
    %4 = vector.load %arg5[%c0_4, %c0_5] : memref<4x1xf32, #tpu.memory_space<vmem>>, vector<4x1xf32>
    %5 = vector.broadcast %4 : vector<4x1xf32> to vector<4x512xf32>
    %6 = arith.addf %3, %5 : vector<4x512xf32>
    %cst_6 = arith.constant 0.00999999977 : f32
    %7 = vector.broadcast %cst_6 : f32 to vector<4x512xf32>
    %8 = arith.mulf %7, %6 : vector<4x512xf32>
    %9 = arith.maximumf %6, %8 : vector<4x512xf32>
    %c17_i32 = arith.constant 17 : i32
    %10 = tpu.dynamic_rotate %9 by %c17_i32 dim 1 : vector<4x512xf32>, i32 -> vector<4x512xf32>
    %c16_i32 = arith.constant 16 : i32
    %11 = tpu.dynamic_rotate %9 by %c16_i32 dim 1 : vector<4x512xf32>, i32 -> vector<4x512xf32>
    %c15_i32 = arith.constant 15 : i32
    %12 = tpu.dynamic_rotate %9 by %c15_i32 dim 1 : vector<4x512xf32>, i32 -> vector<4x512xf32>
    %c1_i32 = arith.constant 1 : i32
    %13 = tpu.dynamic_rotate %9 by %c1_i32 dim 1 : vector<4x512xf32>, i32 -> vector<4x512xf32>
    %c511_i32 = arith.constant 511 : i32
    %14 = tpu.dynamic_rotate %9 by %c511_i32 dim 1 : vector<4x512xf32>, i32 -> vector<4x512xf32>
    %c497_i32 = arith.constant 497 : i32
    %15 = tpu.dynamic_rotate %9 by %c497_i32 dim 1 : vector<4x512xf32>, i32 -> vector<4x512xf32>
    %c496_i32 = arith.constant 496 : i32
    %16 = tpu.dynamic_rotate %9 by %c496_i32 dim 1 : vector<4x512xf32>, i32 -> vector<4x512xf32>
    %c495_i32 = arith.constant 495 : i32
    %17 = tpu.dynamic_rotate %9 by %c495_i32 dim 1 : vector<4x512xf32>, i32 -> vector<4x512xf32>
    %18 = tpu.concatenate %10, %11, %12, %13, %9, %14, %15, %16, %17 in 0 : vector<4x512xf32>, vector<4x512xf32>, vector<4x512xf32>, vector<4x512xf32>, vector<4x512xf32>, vector<4x512xf32>, vector<4x512xf32>, vector<4x512xf32>, vector<4x512xf32> -> vector<36x512xf32>
    %c0_7 = arith.constant 0 : index
    %c0_8 = arith.constant 0 : index
    %19 = vector.load %arg8[%c0_7, %c0_8] : memref<36x512xf32, #tpu.memory_space<vmem>>, vector<36x512xf32>
    %20 = arith.mulf %18, %19 : vector<36x512xf32>
    %c0_9 = arith.constant 0 : index
    %c0_10 = arith.constant 0 : index
    %21 = vector.load %arg3[%c0_9, %c0_10] : memref<8x36xf32, #tpu.memory_space<vmem>>, vector<8x36xf32>
    %cst_11 = arith.constant dense<0.000000e+00> : vector<8x512xf32>
    %22 = tpu.matmul %21, %20, %cst_11 {dimension_numbers = #tpu.dot_dimension_numbers<[1], [0], [0], [1], [0, 0, 1, 1], [], []>} : vector<8x36xf32>, vector<36x512xf32>, vector<8x512xf32> -> vector<8x512xf32>
    %c0_12 = arith.constant 0 : index
    %c0_13 = arith.constant 0 : index
    %23 = vector.load %arg6[%c0_12, %c0_13] : memref<8x1xf32, #tpu.memory_space<vmem>>, vector<8x1xf32>
    %24 = vector.broadcast %23 : vector<8x1xf32> to vector<8x512xf32>
    %25 = arith.addf %22, %24 : vector<8x512xf32>
    %cst_14 = arith.constant 0.00999999977 : f32
    %26 = vector.broadcast %cst_14 : f32 to vector<8x512xf32>
    %27 = arith.mulf %26, %25 : vector<8x512xf32>
    %28 = arith.maximumf %25, %27 : vector<8x512xf32>
    %c0_15 = arith.constant 0 : index
    %c0_16 = arith.constant 0 : index
    %29 = vector.load %arg4[%c0_15, %c0_16] : memref<8x8xf32, #tpu.memory_space<vmem>>, vector<8x8xf32>
    %cst_17 = arith.constant dense<0.000000e+00> : vector<8x512xf32>
    %30 = tpu.matmul %29, %28, %cst_17 {dimension_numbers = #tpu.dot_dimension_numbers<[1], [0], [0], [1], [0, 0, 1, 1], [], []>} : vector<8x8xf32>, vector<8x512xf32>, vector<8x512xf32> -> vector<8x512xf32>
    %c0_18 = arith.constant 0 : index
    %c0_19 = arith.constant 0 : index
    %31 = vector.load %arg7[%c0_18, %c0_19] : memref<8x1xf32, #tpu.memory_space<vmem>>, vector<8x1xf32>
    %32 = vector.broadcast %31 : vector<8x1xf32> to vector<8x512xf32>
    %33 = arith.addf %30, %32 : vector<8x512xf32>
    %cst_20 = arith.constant 0.00999999977 : f32
    %34 = vector.broadcast %cst_20 : f32 to vector<8x512xf32>
    %35 = arith.mulf %34, %33 : vector<8x512xf32>
    %36 = arith.maximumf %33, %35 : vector<8x512xf32>
    %c0_21 = arith.constant 0 : index
    %c0_22 = arith.constant 0 : index
    %c0_23 = arith.constant 0 : index
    %37 = vector.load %arg9[%c0_21, %c0_22, %c0_23] : memref<1x8x512xf32, #tpu.memory_space<vmem>>, vector<1x8x512xf32>
    %38 = vector.shape_cast %37 : vector<1x8x512xf32> to vector<8x512xf32>
    %39 = vector.shape_cast %36 : vector<8x512xf32> to vector<1x8x512xf32>
    tpu.vector_store %arg9[%c0_21, %c0_22, %c0_23], %39 {strides = array<i32>} : memref<1x8x512xf32, #tpu.memory_space<vmem>>, vector<1x8x512xf32>,
    return
  }
  func.func @transform_0(%arg0: i32) -> (i32, i32, i32) {
    %c0_i32 = arith.constant 0 : i32
    %c0_i32_0 = arith.constant 0 : i32
    %c0_i32_1 = arith.constant 0 : i32
    return %arg0, %c0_i32, %c0_i32_0 : i32, i32, i32
  }
  func.func @transform_1(%arg0: i32) -> (i32, i32) {
    %c0_i32 = arith.constant 0 : i32
    %c0_i32_0 = arith.constant 0 : i32
    %c0_i32_1 = arith.constant 0 : i32
    return %c0_i32, %c0_i32_0 : i32, i32
  }
  func.func @transform_2(%arg0: i32) -> (i32, i32) {
    %c0_i32 = arith.constant 0 : i32
    %c0_i32_0 = arith.constant 0 : i32
    %c0_i32_1 = arith.constant 0 : i32
    return %c0_i32, %c0_i32_0 : i32, i32
  }
  func.func @transform_3(%arg0: i32) -> (i32, i32) {
    %c0_i32 = arith.constant 0 : i32
    %c0_i32_0 = arith.constant 0 : i32
    %c0_i32_1 = arith.constant 0 : i32
    return %c0_i32, %c0_i32_0 : i32, i32
  }
  func.func @transform_4(%arg0: i32) -> (i32, i32) {
    %c0_i32 = arith.constant 0 : i32
    %c0_i32_0 = arith.constant 0 : i32
    %c0_i32_1 = arith.constant 0 : i32
    return %c0_i32, %c0_i32_0 : i32, i32
  }
  func.func @transform_5(%arg0: i32) -> (i32, i32) {
    %c0_i32 = arith.constant 0 : i32
    %c0_i32_0 = arith.constant 0 : i32
    %c0_i32_1 = arith.constant 0 : i32
    return %c0_i32, %c0_i32_0 : i32, i32
  }
  func.func @transform_6(%arg0: i32) -> (i32, i32) {
    %c0_i32 = arith.constant 0 : i32
    %c0_i32_0 = arith.constant 0 : i32
    %c0_i32_1 = arith.constant 0 : i32
    return %c0_i32, %c0_i32_0 : i32, i32
  }
  func.func @transform_7(%arg0: i32) -> (i32, i32) {
    %c0_i32 = arith.constant 0 : i32
    %c0_i32_0 = arith.constant 0 : i32
    %c0_i32_1 = arith.constant 0 : i32
    return %c0_i32, %c0_i32_0 : i32, i32
  }
  func.func @transform_8(%arg0: i32) -> (i32, i32, i32) {
    %c0_i32 = arith.constant 0 : i32
    %c0_i32_0 = arith.constant 0 : i32
    %c0_i32_1 = arith.constant 0 : i32
    return %arg0, %c0_i32, %c0_i32_0 : i32, i32, i32
  }
}

</mosaic_0001>

<llo_original>
// kernel: tpu_custom_call.1
$region0: #{tpu_custom_call.1}
  #allocation0 [shape = 'u32[]', space=smem, size = 0x4, offset = 0x4, fixed_abs, tag = 'smem constant byte address 0x4 - core index']
  #allocation1 [shape = 'u32[144,128]{1,0:T(1,128)}', space=vmem, size = 0x12000, scoped, tag = 'internal scratch']
  %s0 = inlined_call_operand.vmem [shape: f32[1,4,512], index: 0, kind: input, shape index: {}]
  %s1 = inlined_call_operand.hbm [shape: f32[4,4], index: 1, kind: input, shape index: {}]
  %s2 = inlined_call_operand.vmem [shape: f32[8,36], index: 2, kind: input, shape index: {}]
  %s3 = inlined_call_operand.vmem [shape: f32[8,8], index: 3, kind: input, shape index: {}]
  %s4 = inlined_call_operand.vmem [shape: f32[4,1], index: 4, kind: input, shape index: {}]
  %s5 = inlined_call_operand.vmem [shape: f32[8,1], index: 5, kind: input, shape index: {}]
  %s6 = inlined_call_operand.vmem [shape: f32[8,1], index: 6, kind: input, shape index: {}]
  %s7 = inlined_call_operand.hbm [shape: f32[36,512], index: 7, kind: input, shape index: {}]
  %s8 = inlined_call_operand.hbm [shape: f32[1,8,512], index: 8, kind: output, shape index: {}]
  %s9 = sld [smem:[#allocation0]]
  $region50: #{tpu_custom_call.1} parent=0
    _
  %s11 = ssub.s32 1, %s9
  %s12 = scalar_select 0, %s11, %s9
  $region1: #{tpu_custom_call.1} parent=0
    #allocation2 [shape = 'u8[2048]{0}', space=vmem, size = 0x800, scoped, tag = 'input window, operand 1, single buffered']
    #allocation3 [shape = 's32[1]{0}', space=sflag, size = 0x4, scoped, tag = 'scoped memory for tpu_custom_call.1']
    #allocation4 [shape = 's32[1]{0}', space=sflag, size = 0x4, scoped, tag = 'scoped memory for tpu_custom_call.1']
    #allocation5 [shape = 'u8[81920]{0}', space=vmem, size = 0x14000, scoped, tag = 'input window, operand 7, single buffered']
    #allocation6 [shape = 's32[1]{0}', space=sflag, size = 0x4, scoped, tag = 'scoped memory for tpu_custom_call.1']
    #allocation7 [shape = 'u8[16384]{0}', space=vmem, size = 0x4000, scoped, tag = 'output window, operand 0, single buffered']
    %13 = vsyncpa [#allocation3], 0
    %14 = vsyncpa [#allocation6], 0
    %15 = vsyncpa [#allocation4], 0
    // Predicated region
    $region2: #{tpu_custom_call.1} parent=1 // pred_check
      _
    $region3: #{tpu_custom_call.1} parent=1 // pred_check_branch
      %17 = sbr.rel (0) target = $region5
    $region4: #{tpu_custom_call.1} parent=1 // pred_region
      _
    $region5: #{tpu_custom_call.1} parent=1 // pred_fallthru
      _
    // Predicated region
    $region6: #{tpu_custom_call.1} parent=1 // pred_check
      _
    $region7: #{tpu_custom_call.1} parent=1 // pred_check_branch
      %19 = sbr.rel (0) target = $region9
    $region8: #{tpu_custom_call.1} parent=1 // pred_region
      %s21 = ssub.s32 64, 64
      %22 = vsyncadd [#allocation3], %s21
      %s24 = sshll.u32 [#allocation2], 4
      %s25 = int_to_ptr.vmem [resolvable:$true] %s24
      %27 = dma.hbm_to_vmem [thread:$0]  %s1, 64, %s25, [#allocation3]
    $region9: #{tpu_custom_call.1} parent=1 // pred_fallthru
      _
    // Predicated region
    $region10: #{tpu_custom_call.1} parent=1 // pred_check
      _
    $region11: #{tpu_custom_call.1} parent=1 // pred_check_branch
      %29 = sbr.rel (0) target = $region13
    $region12: #{tpu_custom_call.1} parent=1 // pred_region
      _
    $region13: #{tpu_custom_call.1} parent=1 // pred_fallthru
      _
    // Predicated region
    $region14: #{tpu_custom_call.1} parent=1 // pred_check
      _
    $region15: #{tpu_custom_call.1} parent=1 // pred_check_branch
      %31 = sbr.rel (0) target = $region17
    $region16: #{tpu_custom_call.1} parent=1 // pred_region
      _
    $region17: #{tpu_custom_call.1} parent=1 // pred_fallthru
      _
    // Predicated region
    $region18: #{tpu_custom_call.1} parent=1 // pred_check
      _
    $region19: #{tpu_custom_call.1} parent=1 // pred_check_branch
      %33 = sbr.rel (0) target = $region21
    $region20: #{tpu_custom_call.1} parent=1 // pred_region
      _
    $region21: #{tpu_custom_call.1} parent=1 // pred_fallthru
      _
    // Predicated region
    $region22: #{tpu_custom_call.1} parent=1 // pred_check
      _
    $region23: #{tpu_custom_call.1} parent=1 // pred_check_branch
      %35 = sbr.rel (0) target = $region25
    $region24: #{tpu_custom_call.1} parent=1 // pred_region
      _
    $region25: #{tpu_custom_call.1} parent=1 // pred_fallthru
      _
    // Predicated region
    $region26: #{tpu_custom_call.1} parent=1 // pred_check
      _
    $region27: #{tpu_custom_call.1} parent=1 // pred_check_branch
      %37 = sbr.rel (0) target = $region29
    $region28: #{tpu_custom_call.1} parent=1 // pred_region
      _
    $region29: #{tpu_custom_call.1} parent=1 // pred_fallthru
      _
    // Predicated region
    $region30: #{tpu_custom_call.1} parent=1 // pred_check
      _
    $region31: #{tpu_custom_call.1} parent=1 // pred_check_branch
      %39 = sbr.rel (0) target = $region33
    $region32: #{tpu_custom_call.1} parent=1 // pred_region
      %s41 = ssub.s32 2560, 2560
      %42 = vsyncadd [#allocation6], %s41
      %s43 = sshll.u32 [#allocation5], 4
      %s44 = int_to_ptr.vmem [resolvable:$true] %s43
      %49 = dma.hbm_to_vmem [thread:$0]  %s7, 2560, %s44, [#allocation6], 512, 512, 32
    $region33: #{tpu_custom_call.1} parent=1 // pred_fallthru
      _
    // Predicated region
    $region34: #{tpu_custom_call.1} parent=1 // pred_check
      _
    $region35: #{tpu_custom_call.1} parent=1 // pred_check_branch
      %51 = sbr.rel (0) target = $region37
    $region36: #{tpu_custom_call.1} parent=1 // pred_region
      %52 = dma.done [#allocation3], 64
    $region37: #{tpu_custom_call.1} parent=1 // pred_fallthru
      _
    // Predicated region
    $region38: #{tpu_custom_call.1} parent=1 // pred_check
      _
    $region39: #{tpu_custom_call.1} parent=1 // pred_check_branch
      %54 = sbr.rel (0) target = $region41
    $region40: #{tpu_custom_call.1} parent=1 // pred_region
      %55 = dma.done [#allocation6], 2560
    $region41: #{tpu_custom_call.1} parent=1 // pred_fallthru
      _
    %v56 = vld [vmem:[%s0] sm:$0xff]
    %v57 = vld [vmem:[%s0 + $0x8] sm:$0xff]
    %v58 = vld [vmem:[#allocation2] sm:$0xf]
    %v59 = vld [vmem:[%s4] sm:$0xf]
    %61 = vset.pattern.permute.xlu0 0
    %62 = vperm.xlu0 %61, %v59
    %v63 = vpop.permute.xlu0 %62
    %v67 = vcombine.high %v56, %v56
    %v68 = vcombine.high %v57, %v57
    %vm69 = vcmask 31744
    %v71 = vsel %vm69, %v58, 0
    %vm73 = vcmask 1043456
    %v74 = vsel %vm73, %v56, 0
    %v76 = vsel %vm73, %v67, 0
    %v78 = vsel %vm73, %v57, 0
    %v80 = vsel %vm73, %v68, 0
    %82 = vmatprep.subr.mxu0 %v76
    %83 = vmatpush1.msra.mxu0 %v74
    %84 = vmatprep.subr.mxu0 0.0
    %85 = vmatpush1.msra.mxu0 0.0
    %86 = vmatprep.subr.mxu0 0.0
    %87 = vmatpush1.msra.mxu0 0.0
    %88 = vmatprep.subr.mxu0 0.0
    %89 = vmatpush1.msra.mxu0 0.0
    %90 = vmatprep.subr.mxu0 0.0
    %91 = vmatpush1.msra.mxu0 0.0
    %92 = vmatprep.subr.mxu0 0.0
    %93 = vmatpush1.msra.mxu0 0.0
    %94 = vmatprep.subr.mxu0 0.0
    %95 = vmatpush1.msra.mxu0 0.0
    %96 = vmatprep.subr.mxu0 0.0
    %97 = vmatpush1.msra.mxu0 0.0
    %98 = vmatprep.subr.mxu0 0.0
    %99 = vmatpush1.msra.mxu0 0.0
    %100 = vmatprep.subr.mxu0 0.0
    %101 = vmatpush1.msra.mxu0 0.0
    %102 = vmatprep.subr.mxu0 0.0
    %103 = vmatpush1.msra.mxu0 0.0
    %104 = vmatprep.subr.mxu0 0.0
    %105 = vmatpush1.msra.mxu0 0.0
    %106 = vmatprep.subr.mxu0 0.0
    %107 = vmatpush1.msra.mxu0 0.0
    %108 = vmatprep.subr.mxu0 0.0
    %109 = vmatpush1.msra.mxu0 0.0
    %110 = vmatprep.subr.mxu0 0.0
    %111 = vmatpush1.msra.mxu0 0.0
    %112 = vmatprep.subr.mxu0 0.0
    %113 = vmatpush1.msra.mxu0 0.0
    %114 = vmatprep.subr.mxu0 0.0
    %115 = vmatpush1.msra.mxu0 0.0
    %116 = vmatprep.subr.mxu0 0.0
    %117 = vmatpush1.msra.mxu0 0.0
    %118 = vmatprep.subr.mxu0 0.0
    %119 = vmatpush1.msra.mxu0 0.0
    %120 = vmatprep.subr.mxu0 0.0
    %121 = vmatpush1.msra.mxu0 0.0
    %122 = vmatprep.subr.mxu0 0.0
    %123 = vmatpush1.msra.mxu0 0.0
    %124 = vmatprep.subr.mxu0 0.0
    %125 = vmatpush1.msra.mxu0 0.0
    %126 = vmatprep.subr.mxu0 0.0
    %127 = vmatpush1.msra.mxu0 0.0
    %128 = vmatprep.subr.mxu0 0.0
    %129 = vmatpush1.msra.mxu0 0.0
    %130 = vmatprep.subr.mxu0 0.0
    %131 = vmatpush1.msra.mxu0 0.0
    %132 = vmatprep.subr.mxu0 0.0
    %133 = vmatpush1.msra.mxu0 0.0
    %134 = vmatprep.subr.mxu0 0.0
    %135 = vmatpush1.msra.mxu0 0.0
    %136 = vmatprep.subr.mxu0 0.0
    %137 = vmatpush1.msra.mxu0 0.0
    %138 = vmatprep.subr.mxu0 0.0
    %139 = vmatpush1.msra.mxu0 0.0
    %140 = vmatprep.subr.mxu0 0.0
    %141 = vmatpush1.msra.mxu0 0.0
    %142 = vmatprep.subr.mxu0 0.0
    %143 = vmatpush1.msra.mxu0 0.0
    %144 = vmatprep.subr.mxu0 0.0
    %145 = vmatpush1.msra.mxu0 0.0
    %146 = vmatprep.mubr.f32.mxu0 0.0
    %147 = vmatmul.mubr.f32.gmra.mrb[0].mxu0 %v71
    %v148 = vpop.f32.mrb[0].mxu0
    %v149 = vadd.f32 %v63, %v148
    %v150 = vpop.f32.mrb[0].mxu0
    %v151 = vadd.f32 %v63, %v150
    %152 = vdwg.mxu0
    %153 = vmatprep.subr.mxu0 %v80
    %154 = vmatpush1.msra.mxu0 %v78
    %155 = vmatprep.subr.mxu0 0.0
    %156 = vmatpush1.msra.mxu0 0.0
    %157 = vmatprep.subr.mxu0 0.0
    %158 = vmatpush1.msra.mxu0 0.0
    %159 = vmatprep.subr.mxu0 0.0
    %160 = vmatpush1.msra.mxu0 0.0
    %161 = vmatprep.subr.mxu0 0.0
    %162 = vmatpush1.msra.mxu0 0.0
    %163 = vmatprep.subr.mxu0 0.0
    %164 = vmatpush1.msra.mxu0 0.0
    %165 = vmatprep.subr.mxu0 0.0
    %166 = vmatpush1.msra.mxu0 0.0
    %167 = vmatprep.subr.mxu0 0.0
    %168 = vmatpush1.msra.mxu0 0.0
    %169 = vmatprep.subr.mxu0 0.0
    %170 = vmatpush1.msra.mxu0 0.0
    %171 = vmatprep.subr.mxu0 0.0
    %172 = vmatpush1.msra.mxu0 0.0
    %173 = vmatprep.subr.mxu0 0.0
    %174 = vmatpush1.msra.mxu0 0.0
    %175 = vmatprep.subr.mxu0 0.0
    %176 = vmatpush1.msra.mxu0 0.0
    %177 = vmatprep.subr.mxu0 0.0
    %178 = vmatpush1.msra.mxu0 0.0
    %179 = vmatprep.subr.mxu0 0.0
    %180 = vmatpush1.msra.mxu0 0.0
    %181 = vmatprep.subr.mxu0 0.0
    %182 = vmatpush1.msra.mxu0 0.0
    %183 = vmatprep.subr.mxu0 0.0
    %184 = vmatpush1.msra.mxu0 0.0
    %185 = vmatprep.subr.mxu0 0.0
    %186 = vmatpush1.msra.mxu0 0.0
    %187 = vmatprep.subr.mxu0 0.0
    %188 = vmatpush1.msra.mxu0 0.0
    %189 = vmatprep.subr.mxu0 0.0
    %190 = vmatpush1.msra.mxu0 0.0
    %191 = vmatprep.subr.mxu0 0.0
    %192 = vmatpush1.msra.mxu0 0.0
    %193 = vmatprep.subr.mxu0 0.0
    %194 = vmatpush1.msra.mxu0 0.0
    %195 = vmatprep.subr.mxu0 0.0
    %196 = vmatpush1.msra.mxu0 0.0
    %197 = vmatprep.subr.mxu0 0.0
    %198 = vmatpush1.msra.mxu0 0.0
    %199 = vmatprep.subr.mxu0 0.0
    %200 = vmatpush1.msra.mxu0 0.0
    %201 = vmatprep.subr.mxu0 0.0
    %202 = vmatpush1.msra.mxu0 0.0
    %203 = vmatprep.subr.mxu0 0.0
    %204 = vmatpush1.msra.mxu0 0.0
    %205 = vmatprep.subr.mxu0 0.0
    %206 = vmatpush1.msra.mxu0 0.0
    %207 = vmatprep.subr.mxu0 0.0
    %208 = vmatpush1.msra.mxu0 0.0
    %209 = vmatprep.subr.mxu0 0.0
    %210 = vmatpush1.msra.mxu0 0.0
    %211 = vmatprep.subr.mxu0 0.0
    %212 = vmatpush1.msra.mxu0 0.0
    %213 = vmatprep.subr.mxu0 0.0
    %214 = vmatpush1.msra.mxu0 0.0
    %215 = vmatprep.subr.mxu0 0.0
    %216 = vmatpush1.msra.mxu0 0.0
    %217 = vmatprep.mubr.f32.mxu0 0.0
    %218 = vmatmul.mubr.f32.gmra.mrb[0].mxu0 %v71
    %v219 = vpop.f32.mrb[0].mxu0
    %v220 = vadd.f32 %v63, %v219
    %v221 = vpop.f32.mrb[0].mxu0
    %v222 = vadd.f32 %v63, %v221
    %223 = vdwg.mxu0
    %v224 = vmul.f32 %v149, 0.01
    %v225 = vmul.f32 %v151, 0.01
    %v226 = vmul.f32 %v220, 0.01
    %v227 = vmul.f32 %v222, 0.01
    %v228 = vmax.f32 %v149, %v224
    %v229 = vmax.f32 %v151, %v225
    %v230 = vmax.f32 %v220, %v226
    %v231 = vmax.f32 %v222, %v227
    %232 = vrot.lane.b32.xlu0 %v228, 17
    %v233 = vpop.permute.xlu0 %232
    %234 = vrot.lane.b32.xlu0 %v229, 17
    %v235 = vpop.permute.xlu0 %234
    %236 = vrot.lane.b32.xlu0 %v230, 17
    %v237 = vpop.permute.xlu0 %236
    %238 = vrot.lane.b32.xlu0 %v231, 17
    %v239 = vpop.permute.xlu0 %238
    %v240 = vlaneseq
    %v241 = vand.u32 %v240, 127
    %vm242 = vcmp.lt.s32.totalorder %v241, 17
    %v243 = vsel %vm242, %v237, %v239
    %v244 = vsel %vm242, %v235, %v237
    %v245 = vsel %vm242, %v233, %v235
    %v246 = vsel %vm242, %v239, %v233
    %247 = vrot.lane.b32.xlu0 %v228, 16
    %v248 = vpop.permute.xlu0 %247
    %249 = vrot.lane.b32.xlu0 %v229, 16
    %v250 = vpop.permute.xlu0 %249
    %251 = vrot.lane.b32.xlu0 %v230, 16
    %v252 = vpop.permute.xlu0 %251
    %253 = vrot.lane.b32.xlu0 %v231, 16
    %v254 = vpop.permute.xlu0 %253
    %vm255 = vcmp.lt.s32.totalorder %v241, 16
    %v256 = vsel %vm255, %v252, %v254
    %v257 = vsel %vm255, %v250, %v252
    %v258 = vsel %vm255, %v248, %v250
    %v259 = vsel %vm255, %v254, %v248
    %260 = vrot.lane.b32.xlu0 %v228, 15
    %v261 = vpop.permute.xlu0 %260
    %262 = vrot.lane.b32.xlu0 %v229, 15
    %v263 = vpop.permute.xlu0 %262
    %264 = vrot.lane.b32.xlu0 %v230, 15
    %v265 = vpop.permute.xlu0 %264
    %266 = vrot.lane.b32.xlu0 %v231, 15
    %v267 = vpop.permute.xlu0 %266
    %vm268 = vcmp.lt.s32.totalorder %v241, 15
    %v269 = vsel %vm268, %v265, %v267
    %v270 = vsel %vm268, %v263, %v265
    %v271 = vsel %vm268, %v261, %v263
    %v272 = vsel %vm268, %v267, %v261
    %273 = vrot.lane.b32.xlu0 %v228, 1
    %v274 = vpop.permute.xlu0 %273
    %275 = vrot.lane.b32.xlu0 %v229, 1
    %v276 = vpop.permute.xlu0 %275
    %277 = vrot.lane.b32.xlu0 %v230, 1
    %v278 = vpop.permute.xlu0 %277
    %279 = vrot.lane.b32.xlu0 %v231, 1
    %v280 = vpop.permute.xlu0 %279
    %vm281 = vcmp.lt.s32.totalorder %v241, 1
    %v282 = vsel %vm281, %v278, %v280
    %v283 = vsel %vm281, %v276, %v278
    %v284 = vsel %vm281, %v274, %v276
    %v285 = vsel %vm281, %v280, %v274
    %286 = vrot.lane.b32.xlu0 %v228, 127
    %v287 = vpop.permute.xlu0 %286
    %288 = vrot.lane.b32.xlu0 %v229, 127
    %v289 = vpop.permute.xlu0 %288
    %290 = vrot.lane.b32.xlu0 %v230, 127
    %v291 = vpop.permute.xlu0 %290
    %292 = vrot.lane.b32.xlu0 %v231, 127
    %v293 = vpop.permute.xlu0 %292
    %vm294 = vcmp.lt.s32.totalorder %v241, 127
    %v295 = vsel %vm294, %v291, %v293
    %v296 = vsel %vm294, %v289, %v291
    %v297 = vsel %vm294, %v287, %v289
    %v298 = vsel %vm294, %v293, %v287
    %299 = vrot.lane.b32.xlu0 %v228, 113
    %v300 = vpop.permute.xlu0 %299
    %301 = vrot.lane.b32.xlu0 %v229, 113
    %v302 = vpop.permute.xlu0 %301
    %303 = vrot.lane.b32.xlu0 %v230, 113
    %v304 = vpop.permute.xlu0 %303
    %305 = vrot.lane.b32.xlu0 %v231, 113
    %v306 = vpop.permute.xlu0 %305
    %vm307 = vcmp.lt.s32.totalorder %v241, 113
    %v308 = vsel %vm307, %v304, %v306
    %v309 = vsel %vm307, %v302, %v304
    %v310 = vsel %vm307, %v300, %v302
    %v311 = vsel %vm307, %v306, %v300
    %312 = vrot.lane.b32.xlu0 %v228, 112
    %v313 = vpop.permute.xlu0 %312
    %314 = vrot.lane.b32.xlu0 %v229, 112
    %v315 = vpop.permute.xlu0 %314
    %316 = vrot.lane.b32.xlu0 %v230, 112
    %v317 = vpop.permute.xlu0 %316
    %318 = vrot.lane.b32.xlu0 %v231, 112
    %v319 = vpop.permute.xlu0 %318
    %vm320 = vcmp.lt.s32.totalorder %v241, 112
    %v321 = vsel %vm320, %v317, %v319
    %v322 = vsel %vm320, %v315, %v317
    %v323 = vsel %vm320, %v313, %v315
    %v324 = vsel %vm320, %v319, %v313
    %325 = vrot.lane.b32.xlu0 %v228, 111
    %v326 = vpop.permute.xlu0 %325
    %327 = vrot.lane.b32.xlu0 %v229, 111
    %v328 = vpop.permute.xlu0 %327
    %329 = vrot.lane.b32.xlu0 %v230, 111
    %v330 = vpop.permute.xlu0 %329
    %331 = vrot.lane.b32.xlu0 %v231, 111
    %v332 = vpop.permute.xlu0 %331
    %vm333 = vcmp.lt.s32.totalorder %v241, 111
    %v334 = vsel %vm333, %v330, %v332
    %v335 = vsel %vm333, %v328, %v330
    %v336 = vsel %vm333, %v326, %v328
    %v337 = vsel %vm333, %v332, %v326
    %v342 = vrot.slane %v259, 4
    %v343 = vrot.slane %v258, 4
    %v344 = vrot.slane %v257, 4
    %v345 = vrot.slane %v256, 4
    %v354 = vrot.slane %v285, 4
    %v355 = vrot.slane %v284, 4
    %v356 = vrot.slane %v283, 4
    %v357 = vrot.slane %v282, 4
    %v366 = vrot.slane %v297, 4
    %v367 = vrot.slane %v296, 4
    %v368 = vrot.slane %v295, 4
    %v369 = vrot.slane %v298, 4
    %v378 = vrot.slane %v323, 4
    %v379 = vrot.slane %v322, 4
    %v380 = vrot.slane %v321, 4
    %v381 = vrot.slane %v324, 4
    %v386 = vsel %vm73, %v246, %v342
    %v387 = vsel %vm73, %v245, %v343
    %v388 = vsel %vm73, %v244, %v344
    %v389 = vsel %vm73, %v243, %v345
    %v390 = vsel %vm73, %v272, %v354
    %v391 = vsel %vm73, %v271, %v355
    %v392 = vsel %vm73, %v270, %v356
    %v393 = vsel %vm73, %v269, %v357
    %v394 = vsel %vm73, %v228, %v366
    %v395 = vsel %vm73, %v229, %v367
    %v396 = vsel %vm73, %v230, %v368
    %v397 = vsel %vm73, %v231, %v369
    %v398 = vsel %vm73, %v310, %v378
    %v399 = vsel %vm73, %v309, %v379
    %v400 = vsel %vm73, %v308, %v380
    %v401 = vsel %vm73, %v311, %v381
    %v402 = vld [vmem:[#allocation5] sm:$0xff]
    %v403 = vld [vmem:[#allocation5 + $0x8] sm:$0xff]
    %v404 = vld [vmem:[#allocation5 + $0x10] sm:$0xff]
    %v405 = vld [vmem:[#allocation5 + $0x18] sm:$0xff]
    %v406 = vld [vmem:[#allocation5 + $0x20] sm:$0xff]
    %v407 = vld [vmem:[#allocation5 + $0x28] sm:$0xff]
    %v408 = vld [vmem:[#allocation5 + $0x30] sm:$0xff]
    %v409 = vld [vmem:[#allocation5 + $0x38] sm:$0xff]
    %v410 = vld [vmem:[#allocation5 + $0x40] sm:$0xff]
    %v411 = vld [vmem:[#allocation5 + $0x48] sm:$0xff]
    %v412 = vld [vmem:[#allocation5 + $0x50] sm:$0xff]
    %v413 = vld [vmem:[#allocation5 + $0x58] sm:$0xff]
    %v414 = vld [vmem:[#allocation5 + $0x60] sm:$0xff]
    %v415 = vld [vmem:[#allocation5 + $0x68] sm:$0xff]
    %v416 = vld [vmem:[#allocation5 + $0x70] sm:$0xff]
    %v417 = vld [vmem:[#allocation5 + $0x78] sm:$0xff]
    %v418 = vld [vmem:[#allocation5 + $0x80] sm:$0xf]
    %v419 = vld [vmem:[#allocation5 + $0x88] sm:$0xf]
    %v420 = vld [vmem:[#allocation5 + $0x90] sm:$0xf]
    %v421 = vld [vmem:[#allocation5 + $0x98] sm:$0xf]
    %v422 = vmul.f32 %v386, %v402
    %v423 = vmul.f32 %v387, %v403
    %v424 = vmul.f32 %v388, %v404
    %v425 = vmul.f32 %v389, %v405
    %v426 = vmul.f32 %v390, %v406
    %v427 = vmul.f32 %v391, %v407
    %v428 = vmul.f32 %v392, %v408
    %v429 = vmul.f32 %v393, %v409
    %v430 = vmul.f32 %v394, %v410
    %v431 = vmul.f32 %v395, %v411
    %v432 = vmul.f32 %v396, %v412
    %v433 = vmul.f32 %v397, %v413
    %v434 = vmul.f32 %v398, %v414
    %v435 = vmul.f32 %v399, %v415
    %v436 = vmul.f32 %v400, %v416
    %v437 = vmul.f32 %v401, %v417
    %v438 = vmul.f32 %v336, %v418
    %v439 = vmul.f32 %v335, %v419
    %v440 = vmul.f32 %v334, %v420
    %v441 = vmul.f32 %v337, %v421
    %v442 = vld [vmem:[%s2] sm:$0xff]
    %v443 = vld [vmem:[%s5] sm:$0xff]
    %445 = vset.pattern.permute.xlu0 0
    %446 = vperm.xlu0 %445, %v443
    %v447 = vpop.permute.xlu0 %446
    %vm449 = vcmask 293888
    %v451 = vsel %vm449, %v442, 0
    %v454 = vsel %vm73, %v438, 0
    %v457 = vsel %vm73, %v439, 0
    %v460 = vsel %vm73, %v440, 0
    %v463 = vsel %vm73, %v441, 0
    %465 = vmatprep.subr.mxu0 %v423
    %466 = vmatpush1.msra.mxu0 %v422
    %467 = vmatprep.subr.mxu0 %v427
    %468 = vmatpush1.msra.mxu0 %v426
    %469 = vmatprep.subr.mxu0 %v431
    %470 = vmatpush1.msra.mxu0 %v430
    %471 = vmatprep.subr.mxu0 %v435
    %472 = vmatpush1.msra.mxu0 %v434
    %473 = vmatprep.subr.mxu0 %v457
    %474 = vmatpush1.msra.mxu0 %v454
    %475 = vmatprep.subr.mxu0 0.0
    %476 = vmatpush1.msra.mxu0 0.0
    %477 = vmatprep.subr.mxu0 0.0
    %478 = vmatpush1.msra.mxu0 0.0
    %479 = vmatprep.subr.mxu0 0.0
    %480 = vmatpush1.msra.mxu0 0.0
    %481 = vmatprep.subr.mxu0 0.0
    %482 = vmatpush1.msra.mxu0 0.0
    %483 = vmatprep.subr.mxu0 0.0
    %484 = vmatpush1.msra.mxu0 0.0
    %485 = vmatprep.subr.mxu0 0.0
    %486 = vmatpush1.msra.mxu0 0.0
    %487 = vmatprep.subr.mxu0 0.0
    %488 = vmatpush1.msra.mxu0 0.0
    %489 = vmatprep.subr.mxu0 0.0
    %490 = vmatpush1.msra.mxu0 0.0
    %491 = vmatprep.subr.mxu0 0.0
    %492 = vmatpush1.msra.mxu0 0.0
    %493 = vmatprep.subr.mxu0 0.0
    %494 = vmatpush1.msra.mxu0 0.0
    %495 = vmatprep.subr.mxu0 0.0
    %496 = vmatpush1.msra.mxu0 0.0
    %497 = vmatprep.subr.mxu0 0.0
    %498 = vmatpush1.msra.mxu0 0.0
    %499 = vmatprep.subr.mxu0 0.0
    %500 = vmatpush1.msra.mxu0 0.0
    %501 = vmatprep.subr.mxu0 0.0
    %502 = vmatpush1.msra.mxu0 0.0
    %503 = vmatprep.subr.mxu0 0.0
    %504 = vmatpush1.msra.mxu0 0.0
    %505 = vmatprep.subr.mxu0 0.0
    %506 = vmatpush1.msra.mxu0 0.0
    %507 = vmatprep.subr.mxu0 0.0
    %508 = vmatpush1.msra.mxu0 0.0
    %509 = vmatprep.subr.mxu0 0.0
    %510 = vmatpush1.msra.mxu0 0.0
    %511 = vmatprep.subr.mxu0 0.0
    %512 = vmatpush1.msra.mxu0 0.0
    %513 = vmatprep.subr.mxu0 0.0
    %514 = vmatpush1.msra.mxu0 0.0
    %515 = vmatprep.subr.mxu0 0.0
    %516 = vmatpush1.msra.mxu0 0.0
    %517 = vmatprep.subr.mxu0 0.0
    %518 = vmatpush1.msra.mxu0 0.0
    %519 = vmatprep.subr.mxu0 0.0
    %520 = vmatpush1.msra.mxu0 0.0
    %521 = vmatprep.subr.mxu0 0.0
    %522 = vmatpush1.msra.mxu0 0.0
    %523 = vmatprep.subr.mxu0 0.0
    %524 = vmatpush1.msra.mxu0 0.0
    %525 = vmatprep.subr.mxu0 0.0
    %526 = vmatpush1.msra.mxu0 0.0
    %527 = vmatprep.subr.mxu0 0.0
    %528 = vmatpush1.msra.mxu0 0.0
    %529 = vmatprep.mubr.f32.mxu0 0.0
    %530 = vmatmul.mubr.f32.gmra.mrb[0].mxu0 %v451
    %v531 = vpop.f32.mrb[0].mxu0
    %v532 = vadd.f32 %v447, %v531
    %v533 = vpop.f32.mrb[0].mxu0
    %v534 = vadd.f32 %v447, %v533
    %535 = vdwg.mxu0
    %536 = vmatprep.subr.mxu0 %v425
    %537 = vmatpush1.msra.mxu0 %v424
    %538 = vmatprep.subr.mxu0 %v429
    %539 = vmatpush1.msra.mxu0 %v428
    %540 = vmatprep.subr.mxu0 %v433
    %541 = vmatpush1.msra.mxu0 %v432
    %542 = vmatprep.subr.mxu0 %v437
    %543 = vmatpush1.msra.mxu0 %v436
    %544 = vmatprep.subr.mxu0 %v463
    %545 = vmatpush1.msra.mxu0 %v460
    %546 = vmatprep.subr.mxu0 0.0
    %547 = vmatpush1.msra.mxu0 0.0
    %548 = vmatprep.subr.mxu0 0.0
    %549 = vmatpush1.msra.mxu0 0.0
    %550 = vmatprep.subr.mxu0 0.0
    %551 = vmatpush1.msra.mxu0 0.0
    %552 = vmatprep.subr.mxu0 0.0
    %553 = vmatpush1.msra.mxu0 0.0
    %554 = vmatprep.subr.mxu0 0.0
    %555 = vmatpush1.msra.mxu0 0.0
    %556 = vmatprep.subr.mxu0 0.0
    %557 = vmatpush1.msra.mxu0 0.0
    %558 = vmatprep.subr.mxu0 0.0
    %559 = vmatpush1.msra.mxu0 0.0
    %560 = vmatprep.subr.mxu0 0.0
    %561 = vmatpush1.msra.mxu0 0.0
    %562 = vmatprep.subr.mxu0 0.0
    %563 = vmatpush1.msra.mxu0 0.0
    %564 = vmatprep.subr.mxu0 0.0
    %565 = vmatpush1.msra.mxu0 0.0
    %566 = vmatprep.subr.mxu0 0.0
    %567 = vmatpush1.msra.mxu0 0.0
    %568 = vmatprep.subr.mxu0 0.0
    %569 = vmatpush1.msra.mxu0 0.0
    %570 = vmatprep.subr.mxu0 0.0
    %571 = vmatpush1.msra.mxu0 0.0
    %572 = vmatprep.subr.mxu0 0.0
    %573 = vmatpush1.msra.mxu0 0.0
    %574 = vmatprep.subr.mxu0 0.0
    %575 = vmatpush1.msra.mxu0 0.0
    %576 = vmatprep.subr.mxu0 0.0
    %577 = vmatpush1.msra.mxu0 0.0
    %578 = vmatprep.subr.mxu0 0.0
    %579 = vmatpush1.msra.mxu0 0.0
    %580 = vmatprep.subr.mxu0 0.0
    %581 = vmatpush1.msra.mxu0 0.0
    %582 = vmatprep.subr.mxu0 0.0
    %583 = vmatpush1.msra.mxu0 0.0
    %584 = vmatprep.subr.mxu0 0.0
    %585 = vmatpush1.msra.mxu0 0.0
    %586 = vmatprep.subr.mxu0 0.0
    %587 = vmatpush1.msra.mxu0 0.0
    %588 = vmatprep.subr.mxu0 0.0
    %589 = vmatpush1.msra.mxu0 0.0
    %590 = vmatprep.subr.mxu0 0.0
    %591 = vmatpush1.msra.mxu0 0.0
    %592 = vmatprep.subr.mxu0 0.0
    %593 = vmatpush1.msra.mxu0 0.0
    %594 = vmatprep.subr.mxu0 0.0
    %595 = vmatpush1.msra.mxu0 0.0
    %596 = vmatprep.subr.mxu0 0.0
    %597 = vmatpush1.msra.mxu0 0.0
    %598 = vmatprep.subr.mxu0 0.0
    %599 = vmatpush1.msra.mxu0 0.0
    %600 = vmatprep.mubr.f32.mxu0 0.0
    %601 = vmatmul.mubr.f32.gmra.mrb[0].mxu0 %v451
    %v602 = vpop.f32.mrb[0].mxu0
    %v603 = vadd.f32 %v447, %v602
    %v604 = vpop.f32.mrb[0].mxu0
    %v605 = vadd.f32 %v447, %v604
    %606 = vdwg.mxu0
    %v607 = vmul.f32 %v532, 0.01
    %v608 = vmul.f32 %v534, 0.01
    %v609 = vmul.f32 %v603, 0.01
    %v610 = vmul.f32 %v605, 0.01
    %v611 = vmax.f32 %v532, %v607
    %v612 = vmax.f32 %v534, %v608
    %v613 = vmax.f32 %v603, %v609
    %v614 = vmax.f32 %v605, %v610
    %v615 = vld [vmem:[%s3] sm:$0xff]
    %v616 = vld [vmem:[%s6] sm:$0xff]
    %618 = vset.pattern.permute.xlu0 0
    %619 = vperm.xlu0 %618, %v616
    %v620 = vpop.permute.xlu0 %619
    %vm622 = vcmask 64512
    %v624 = vsel %vm622, %v615, 0
    %626 = vmatprep.subr.mxu0 %v612
    %627 = vmatpush1.msra.mxu0 %v611
    %628 = vmatprep.subr.mxu0 0.0
    %629 = vmatpush1.msra.mxu0 0.0
    %630 = vmatprep.subr.mxu0 0.0
    %631 = vmatpush1.msra.mxu0 0.0
    %632 = vmatprep.subr.mxu0 0.0
    %633 = vmatpush1.msra.mxu0 0.0
    %634 = vmatprep.subr.mxu0 0.0
    %635 = vmatpush1.msra.mxu0 0.0
    %636 = vmatprep.subr.mxu0 0.0
    %637 = vmatpush1.msra.mxu0 0.0
    %638 = vmatprep.subr.mxu0 0.0
    %639 = vmatpush1.msra.mxu0 0.0
    %640 = vmatprep.subr.mxu0 0.0
    %641 = vmatpush1.msra.mxu0 0.0
    %642 = vmatprep.subr.mxu0 0.0
    %643 = vmatpush1.msra.mxu0 0.0
    %644 = vmatprep.subr.mxu0 0.0
    %645 = vmatpush1.msra.mxu0 0.0
    %646 = vmatprep.subr.mxu0 0.0
    %647 = vmatpush1.msra.mxu0 0.0
    %648 = vmatprep.subr.mxu0 0.0
    %649 = vmatpush1.msra.mxu0 0.0
    %650 = vmatprep.subr.mxu0 0.0
    %651 = vmatpush1.msra.mxu0 0.0
    %652 = vmatprep.subr.mxu0 0.0
    %653 = vmatpush1.msra.mxu0 0.0
    %654 = vmatprep.subr.mxu0 0.0
    %655 = vmatpush1.msra.mxu0 0.0
    %656 = vmatprep.subr.mxu0 0.0
    %657 = vmatpush1.msra.mxu0 0.0
    %658 = vmatprep.subr.mxu0 0.0
    %659 = vmatpush1.msra.mxu0 0.0
    %660 = vmatprep.subr.mxu0 0.0
    %661 = vmatpush1.msra.mxu0 0.0
    %662 = vmatprep.subr.mxu0 0.0
    %663 = vmatpush1.msra.mxu0 0.0
    %664 = vmatprep.subr.mxu0 0.0
    %665 = vmatpush1.msra.mxu0 0.0
    %666 = vmatprep.subr.mxu0 0.0
    %667 = vmatpush1.msra.mxu0 0.0
    %668 = vmatprep.subr.mxu0 0.0
    %669 = vmatpush1.msra.mxu0 0.0
    %670 = vmatprep.subr.mxu0 0.0
    %671 = vmatpush1.msra.mxu0 0.0
    %672 = vmatprep.subr.mxu0 0.0
    %673 = vmatpush1.msra.mxu0 0.0
    %674 = vmatprep.subr.mxu0 0.0
    %675 = vmatpush1.msra.mxu0 0.0
    %676 = vmatprep.subr.mxu0 0.0
    %677 = vmatpush1.msra.mxu0 0.0
    %678 = vmatprep.subr.mxu0 0.0
    %679 = vmatpush1.msra.mxu0 0.0
    %680 = vmatprep.subr.mxu0 0.0
    %681 = vmatpush1.msra.mxu0 0.0
    %682 = vmatprep.subr.mxu0 0.0
    %683 = vmatpush1.msra.mxu0 0.0
    %684 = vmatprep.subr.mxu0 0.0
    %685 = vmatpush1.msra.mxu0 0.0
    %686 = vmatprep.subr.mxu0 0.0
    %687 = vmatpush1.msra.mxu0 0.0
    %688 = vmatprep.subr.mxu0 0.0
    %689 = vmatpush1.msra.mxu0 0.0
    %690 = vmatprep.mubr.f32.mxu0 0.0
    %691 = vmatmul.mubr.f32.gmra.mrb[0].mxu0 %v624
    %v692 = vpop.f32.mrb[0].mxu0
    %v693 = vadd.f32 %v620, %v692
    %v694 = vpop.f32.mrb[0].mxu0
    %v695 = vadd.f32 %v620, %v694
    %696 = vdwg.mxu0
    %697 = vmatprep.subr.mxu0 %v614
    %698 = vmatpush1.msra.mxu0 %v613
    %699 = vmatprep.subr.mxu0 0.0
    %700 = vmatpush1.msra.mxu0 0.0
    %701 = vmatprep.subr.mxu0 0.0
    %702 = vmatpush1.msra.mxu0 0.0
    %703 = vmatprep.subr.mxu0 0.0
    %704 = vmatpush1.msra.mxu0 0.0
    %705 = vmatprep.subr.mxu0 0.0
    %706 = vmatpush1.msra.mxu0 0.0
    %707 = vmatprep.subr.mxu0 0.0
    %708 = vmatpush1.msra.mxu0 0.0
    %709 = vmatprep.subr.mxu0 0.0
    %710 = vmatpush1.msra.mxu0 0.0
    %711 = vmatprep.subr.mxu0 0.0
    %712 = vmatpush1.msra.mxu0 0.0
    %713 = vmatprep.subr.mxu0 0.0
    %714 = vmatpush1.msra.mxu0 0.0
    %715 = vmatprep.subr.mxu0 0.0
    %716 = vmatpush1.msra.mxu0 0.0
    %717 = vmatprep.subr.mxu0 0.0
    %718 = vmatpush1.msra.mxu0 0.0
    %719 = vmatprep.subr.mxu0 0.0
    %720 = vmatpush1.msra.mxu0 0.0
    %721 = vmatprep.subr.mxu0 0.0
    %722 = vmatpush1.msra.mxu0 0.0
    %723 = vmatprep.subr.mxu0 0.0
    %724 = vmatpush1.msra.mxu0 0.0
    %725 = vmatprep.subr.mxu0 0.0
    %726 = vmatpush1.msra.mxu0 0.0
    %727 = vmatprep.subr.mxu0 0.0
    %728 = vmatpush1.msra.mxu0 0.0
    %729 = vmatprep.subr.mxu0 0.0
    %730 = vmatpush1.msra.mxu0 0.0
    %731 = vmatprep.subr.mxu0 0.0
    %732 = vmatpush1.msra.mxu0 0.0
    %733 = vmatprep.subr.mxu0 0.0
    %734 = vmatpush1.msra.mxu0 0.0
    %735 = vmatprep.subr.mxu0 0.0
    %736 = vmatpush1.msra.mxu0 0.0
    %737 = vmatprep.subr.mxu0 0.0
    %738 = vmatpush1.msra.mxu0 0.0
    %739 = vmatprep.subr.mxu0 0.0
    %740 = vmatpush1.msra.mxu0 0.0
    %741 = vmatprep.subr.mxu0 0.0
    %742 = vmatpush1.msra.mxu0 0.0
    %743 = vmatprep.subr.mxu0 0.0
    %744 = vmatpush1.msra.mxu0 0.0
    %745 = vmatprep.subr.mxu0 0.0
    %746 = vmatpush1.msra.mxu0 0.0
    %747 = vmatprep.subr.mxu0 0.0
    %748 = vmatpush1.msra.mxu0 0.0
    %749 = vmatprep.subr.mxu0 0.0
    %750 = vmatpush1.msra.mxu0 0.0
    %751 = vmatprep.subr.mxu0 0.0
    %752 = vmatpush1.msra.mxu0 0.0
    %753 = vmatprep.subr.mxu0 0.0
    %754 = vmatpush1.msra.mxu0 0.0
    %755 = vmatprep.subr.mxu0 0.0
    %756 = vmatpush1.msra.mxu0 0.0
    %757 = vmatprep.subr.mxu0 0.0
    %758 = vmatpush1.msra.mxu0 0.0
    %759 = vmatprep.subr.mxu0 0.0
    %760 = vmatpush1.msra.mxu0 0.0
    %761 = vmatprep.mubr.f32.mxu0 0.0
    %762 = vmatmul.mubr.f32.gmra.mrb[0].mxu0 %v624
    %v763 = vpop.f32.mrb[0].mxu0
    %v764 = vadd.f32 %v620, %v763
    %v765 = vpop.f32.mrb[0].mxu0
    %v766 = vadd.f32 %v620, %v765
    %767 = vdwg.mxu0
    %v768 = vmul.f32 %v693, 0.01
    %v769 = vmul.f32 %v695, 0.01
    %v770 = vmul.f32 %v764, 0.01
    %v771 = vmul.f32 %v766, 0.01
    %v772 = vmax.f32 %v693, %v768
    %v773 = vmax.f32 %v695, %v769
    %v774 = vmax.f32 %v764, %v770
    %v775 = vmax.f32 %v766, %v771
    %776 = vst [vmem:[#allocation7] sm:$0xff] %v772
    %777 = vst [vmem:[#allocation7 + $0x8] sm:$0xff] %v773
    %778 = vst [vmem:[#allocation7 + $0x10] sm:$0xff] %v774
    %779 = vst [vmem:[#allocation7 + $0x18] sm:$0xff] %v775
    // Predicated region
    $region42: #{tpu_custom_call.1} parent=1 // pred_check
      _
    $region43: #{tpu_custom_call.1} parent=1 // pred_check_branch
      %781 = sbr.rel (0) target = $region45
    $region44: #{tpu_custom_call.1} parent=1 // pred_region
      %s783 = ssub.s32 512, 512
      %784 = vsyncadd [#allocation4], %s783
      %s786 = sshll.u32 [#allocation7], 4
      %s787 = int_to_ptr.vmem [resolvable:$true] %s786
      %789 = dma.vmem_to_hbm [thread:$0]  %s787, 512, %s8, [#allocation4]
    $region45: #{tpu_custom_call.1} parent=1 // pred_fallthru
      _
    // Predicated region
    $region46: #{tpu_custom_call.1} parent=1 // pred_check
      _
    $region47: #{tpu_custom_call.1} parent=1 // pred_check_branch
      %791 = sbr.rel (0) target = $region49
    $region48: #{tpu_custom_call.1} parent=1 // pred_region
      %792 = dma.done [#allocation4], 512
    $region49: #{tpu_custom_call.1} parent=1 // pred_fallthru
      _
    %793 = vsyncpa [#allocation3], 1
    %794 = vsyncpa [#allocation6], 1
    %795 = vsyncpa [#allocation4], 1

// kernel: tpu_custom_call.1
$region0: #{tpu_custom_call.1}
  #allocation0 [shape = 'u32[]', space=smem, size = 0x4, offset = 0x4, fixed_abs, tag = 'smem constant byte address 0x4 - core index']
  #allocation1 [shape = 'u32[144,128]{1,0:T(1,128)}', space=vmem, size = 0x12000, scoped, tag = 'internal scratch']
  %s0 = inlined_call_operand.vmem [shape: f32[1,4,512], index: 0, kind: input, shape index: {}]
  %s1 = inlined_call_operand.hbm [shape: f32[4,4], index: 1, kind: input, shape index: {}]
  %s2 = inlined_call_operand.vmem [shape: f32[8,36], index: 2, kind: input, shape index: {}]
  %s3 = inlined_call_operand.vmem [shape: f32[8,8], index: 3, kind: input, shape index: {}]
  %s4 = inlined_call_operand.vmem [shape: f32[4,1], index: 4, kind: input, shape index: {}]
  %s5 = inlined_call_operand.vmem [shape: f32[8,1], index: 5, kind: input, shape index: {}]
  %s6 = inlined_call_operand.vmem [shape: f32[8,1], index: 6, kind: input, shape index: {}]
  %s7 = inlined_call_operand.hbm [shape: f32[36,512], index: 7, kind: input, shape index: {}]
  %s8 = inlined_call_operand.hbm [shape: f32[1,8,512], index: 8, kind: output, shape index: {}]
  %s9 = sld [smem:[#allocation0]]
  $region50: #{tpu_custom_call.1} parent=0
    _
  %s11 = ssub.s32 1, %s9
  %s12 = scalar_select 0, %s11, %s9
  $region1: #{tpu_custom_call.1} parent=0
    #allocation2 [shape = 'u8[2048]{0}', space=vmem, size = 0x800, scoped, tag = 'input window, operand 1, single buffered']
    #allocation3 [shape = 's32[1]{0}', space=sflag, size = 0x4, scoped, tag = 'scoped memory for tpu_custom_call.1']
    #allocation4 [shape = 's32[1]{0}', space=sflag, size = 0x4, scoped, tag = 'scoped memory for tpu_custom_call.1']
    #allocation5 [shape = 'u8[81920]{0}', space=vmem, size = 0x14000, scoped, tag = 'input window, operand 7, single buffered']
    #allocation6 [shape = 's32[1]{0}', space=sflag, size = 0x4, scoped, tag = 'scoped memory for tpu_custom_call.1']
    #allocation7 [shape = 'u8[16384]{0}', space=vmem, size = 0x4000, scoped, tag = 'output window, operand 0, single buffered']
    %13 = vsyncpa [#allocation3], 0
    %14 = vsyncpa [#allocation6], 0
    %15 = vsyncpa [#allocation4], 0
    // Predicated region
    $region2: #{tpu_custom_call.1} parent=1 // pred_check
      _
    $region3: #{tpu_custom_call.1} parent=1 // pred_check_branch
      %17 = sbr.rel (0) target = $region5
    $region4: #{tpu_custom_call.1} parent=1 // pred_region
      _
    $region5: #{tpu_custom_call.1} parent=1 // pred_fallthru
      _
    // Predicated region
    $region6: #{tpu_custom_call.1} parent=1 // pred_check
      _
    $region7: #{tpu_custom_call.1} parent=1 // pred_check_branch
      %19 = sbr.rel (0) target = $region9
    $region8: #{tpu_custom_call.1} parent=1 // pred_region
      %s21 = ssub.s32 64, 64
      %22 = vsyncadd [#allocation3], %s21
      %s24 = sshll.u32 [#allocation2], 4
      %s25 = int_to_ptr.vmem [resolvable:$true] %s24
      %27 = dma.hbm_to_vmem [thread:$0]  %s1, 64, %s25, [#allocation3]
    $region9: #{tpu_custom_call.1} parent=1 // pred_fallthru
      _
    // Predicated region
    $region10: #{tpu_custom_call.1} parent=1 // pred_check
      _
    $region11: #{tpu_custom_call.1} parent=1 // pred_check_branch
      %29 = sbr.rel (0) target = $region13
    $region12: #{tpu_custom_call.1} parent=1 // pred_region
      _
    $region13: #{tpu_custom_call.1} parent=1 // pred_fallthru
      _
    // Predicated region
    $region14: #{tpu_custom_call.1} parent=1 // pred_check
      _
    $region15: #{tpu_custom_call.1} parent=1 // pred_check_branch
      %31 = sbr.rel (0) target = $region17
    $region16: #{tpu_custom_call.1} parent=1 // pred_region
      _
    $region17: #{tpu_custom_call.1} parent=1 // pred_fallthru
      _
    // Predicated region
    $region18: #{tpu_custom_call.1} parent=1 // pred_check
      _
    $region19: #{tpu_custom_call.1} parent=1 // pred_check_branch
      %33 = sbr.rel (0) target = $region21
    $region20: #{tpu_custom_call.1} parent=1 // pred_region
      _
    $region21: #{tpu_custom_call.1} parent=1 // pred_fallthru
      _
    // Predicated region
    $region22: #{tpu_custom_call.1} parent=1 // pred_check
      _
    $region23: #{tpu_custom_call.1} parent=1 // pred_check_branch
      %35 = sbr.rel (0) target = $region25
    $region24: #{tpu_custom_call.1} parent=1 // pred_region
      _
    $region25: #{tpu_custom_call.1} parent=1 // pred_fallthru
      _
    // Predicated region
    $region26: #{tpu_custom_call.1} parent=1 // pred_check
      _
    $region27: #{tpu_custom_call.1} parent=1 // pred_check_branch
      %37 = sbr.rel (0) target = $region29
    $region28: #{tpu_custom_call.1} parent=1 // pred_region
      _
    $region29: #{tpu_custom_call.1} parent=1 // pred_fallthru
      _
    // Predicated region
    $region30: #{tpu_custom_call.1} parent=1 // pred_check
      _
    $region31: #{tpu_custom_call.1} parent=1 // pred_check_branch
      %39 = sbr.rel (0) target = $region33
    $region32: #{tpu_custom_call.1} parent=1 // pred_region
      %s41 = ssub.s32 2560, 2560
      %42 = vsyncadd [#allocation6], %s41
      %s43 = sshll.u32 [#allocation5], 4
      %s44 = int_to_ptr.vmem [resolvable:$true] %s43
      %49 = dma.hbm_to_vmem [thread:$0]  %s7, 2560, %s44, [#allocation6], 512, 512, 32
    $region33: #{tpu_custom_call.1} parent=1 // pred_fallthru
      _
    // Predicated region
    $region34: #{tpu_custom_call.1} parent=1 // pred_check
      _
    $region35: #{tpu_custom_call.1} parent=1 // pred_check_branch
      %51 = sbr.rel (0) target = $region37
    $region36: #{tpu_custom_call.1} parent=1 // pred_region
      %52 = dma.done [#allocation3], 64
    $region37: #{tpu_custom_call.1} parent=1 // pred_fallthru
      _
    // Predicated region
    $region38: #{tpu_custom_call.1} parent=1 // pred_check
      _
    $region39: #{tpu_custom_call.1} parent=1 // pred_check_branch
      %54 = sbr.rel (0) target = $region41
    $region40: #{tpu_custom_call.1} parent=1 // pred_region
      %55 = dma.done [#allocation6], 2560
    $region41: #{tpu_custom_call.1} parent=1 // pred_fallthru
      _
    %v56 = vld [vmem:[%s0] sm:$0xff]
    %v57 = vld [vmem:[%s0 + $0x8] sm:$0xff]
    %v58 = vld [vmem:[#allocation2] sm:$0xf]
    %v59 = vld [vmem:[%s4] sm:$0xf]
    %61 = vset.pattern.permute.xlu0 0
    %62 = vperm.xlu0 %61, %v59
    %v63 = vpop.permute.xlu0 %62
    %v67 = vcombine.high %v56, %v56
    %v68 = vcombine.high %v57, %v57
    %vm69 = vcmask 31744
    %v71 = vsel %vm69, %v58, 0
    %vm73 = vcmask 1043456
    %v74 = vsel %vm73, %v56, 0
    %v76 = vsel %vm73, %v67, 0
    %v78 = vsel %vm73, %v57, 0
    %v80 = vsel %vm73, %v68, 0
    %82 = vmatprep.subr.mxu0 %v76
    %83 = vmatpush1.msra.mxu0 %v74
    %84 = vmatprep.subr.mxu0 0.0
    %85 = vmatpush1.msra.mxu0 0.0
    %86 = vmatprep.subr.mxu0 0.0
    %87 = vmatpush1.msra.mxu0 0.0
    %88 = vmatprep.subr.mxu0 0.0
    %89 = vmatpush1.msra.mxu0 0.0
    %90 = vmatprep.subr.mxu0 0.0
    %91 = vmatpush1.msra.mxu0 0.0
    %92 = vmatprep.subr.mxu0 0.0
    %93 = vmatpush1.msra.mxu0 0.0
    %94 = vmatprep.subr.mxu0 0.0
    %95 = vmatpush1.msra.mxu0 0.0
    %96 = vmatprep.subr.mxu0 0.0
    %97 = vmatpush1.msra.mxu0 0.0
    %98 = vmatprep.subr.mxu0 0.0
    %99 = vmatpush1.msra.mxu0 0.0
    %100 = vmatprep.subr.mxu0 0.0
    %101 = vmatpush1.msra.mxu0 0.0
    %102 = vmatprep.subr.mxu0 0.0
    %103 = vmatpush1.msra.mxu0 0.0
    %104 = vmatprep.subr.mxu0 0.0
    %105 = vmatpush1.msra.mxu0 0.0
    %106 = vmatprep.subr.mxu0 0.0
    %107 = vmatpush1.msra.mxu0 0.0
    %108 = vmatprep.subr.mxu0 0.0
    %109 = vmatpush1.msra.mxu0 0.0
    %110 = vmatprep.subr.mxu0 0.0
    %111 = vmatpush1.msra.mxu0 0.0
    %112 = vmatprep.subr.mxu0 0.0
    %113 = vmatpush1.msra.mxu0 0.0
    %114 = vmatprep.subr.mxu0 0.0
    %115 = vmatpush1.msra.mxu0 0.0
    %116 = vmatprep.subr.mxu0 0.0
    %117 = vmatpush1.msra.mxu0 0.0
    %118 = vmatprep.subr.mxu0 0.0
    %119 = vmatpush1.msra.mxu0 0.0
    %120 = vmatprep.subr.mxu0 0.0
    %121 = vmatpush1.msra.mxu0 0.0
    %122 = vmatprep.subr.mxu0 0.0
    %123 = vmatpush1.msra.mxu0 0.0
    %124 = vmatprep.subr.mxu0 0.0
    %125 = vmatpush1.msra.mxu0 0.0
    %126 = vmatprep.subr.mxu0 0.0
    %127 = vmatpush1.msra.mxu0 0.0
    %128 = vmatprep.subr.mxu0 0.0
    %129 = vmatpush1.msra.mxu0 0.0
    %130 = vmatprep.subr.mxu0 0.0
    %131 = vmatpush1.msra.mxu0 0.0
    %132 = vmatprep.subr.mxu0 0.0
    %133 = vmatpush1.msra.mxu0 0.0
    %134 = vmatprep.subr.mxu0 0.0
    %135 = vmatpush1.msra.mxu0 0.0
    %136 = vmatprep.subr.mxu0 0.0
    %137 = vmatpush1.msra.mxu0 0.0
    %138 = vmatprep.subr.mxu0 0.0
    %139 = vmatpush1.msra.mxu0 0.0
    %140 = vmatprep.subr.mxu0 0.0
    %141 = vmatpush1.msra.mxu0 0.0
    %142 = vmatprep.subr.mxu0 0.0
    %143 = vmatpush1.msra.mxu0 0.0
    %144 = vmatprep.subr.mxu0 0.0
    %145 = vmatpush1.msra.mxu0 0.0
    %146 = vmatprep.mubr.f32.mxu0 0.0
    %147 = vmatmul.mubr.f32.gmra.mrb[0].mxu0 %v71
    %v148 = vpop.f32.mrb[0].mxu0
    %v149 = vadd.f32 %v63, %v148
    %v150 = vpop.f32.mrb[0].mxu0
    %v151 = vadd.f32 %v63, %v150
    %152 = vdwg.mxu0
    %153 = vmatprep.subr.mxu0 %v80
    %154 = vmatpush1.msra.mxu0 %v78
    %155 = vmatprep.subr.mxu0 0.0
    %156 = vmatpush1.msra.mxu0 0.0
    %157 = vmatprep.subr.mxu0 0.0
    %158 = vmatpush1.msra.mxu0 0.0
    %159 = vmatprep.subr.mxu0 0.0
    %160 = vmatpush1.msra.mxu0 0.0
    %161 = vmatprep.subr.mxu0 0.0
    %162 = vmatpush1.msra.mxu0 0.0
    %163 = vmatprep.subr.mxu0 0.0
    %164 = vmatpush1.msra.mxu0 0.0
    %165 = vmatprep.subr.mxu0 0.0
    %166 = vmatpush1.msra.mxu0 0.0
    %167 = vmatprep.subr.mxu0 0.0
    %168 = vmatpush1.msra.mxu0 0.0
    %169 = vmatprep.subr.mxu0 0.0
    %170 = vmatpush1.msra.mxu0 0.0
    %171 = vmatprep.subr.mxu0 0.0
    %172 = vmatpush1.msra.mxu0 0.0
    %173 = vmatprep.subr.mxu0 0.0
    %174 = vmatpush1.msra.mxu0 0.0
    %175 = vmatprep.subr.mxu0 0.0
    %176 = vmatpush1.msra.mxu0 0.0
    %177 = vmatprep.subr.mxu0 0.0
    %178 = vmatpush1.msra.mxu0 0.0
    %179 = vmatprep.subr.mxu0 0.0
    %180 = vmatpush1.msra.mxu0 0.0
    %181 = vmatprep.subr.mxu0 0.0
    %182 = vmatpush1.msra.mxu0 0.0
    %183 = vmatprep.subr.mxu0 0.0
    %184 = vmatpush1.msra.mxu0 0.0
    %185 = vmatprep.subr.mxu0 0.0
    %186 = vmatpush1.msra.mxu0 0.0
    %187 = vmatprep.subr.mxu0 0.0
    %188 = vmatpush1.msra.mxu0 0.0
    %189 = vmatprep.subr.mxu0 0.0
    %190 = vmatpush1.msra.mxu0 0.0
    %191 = vmatprep.subr.mxu0 0.0
    %192 = vmatpush1.msra.mxu0 0.0
    %193 = vmatprep.subr.mxu0 0.0
    %194 = vmatpush1.msra.mxu0 0.0
    %195 = vmatprep.subr.mxu0 0.0
    %196 = vmatpush1.msra.mxu0 0.0
    %197 = vmatprep.subr.mxu0 0.0
    %198 = vmatpush1.msra.mxu0 0.0
    %199 = vmatprep.subr.mxu0 0.0
    %200 = vmatpush1.msra.mxu0 0.0
    %201 = vmatprep.subr.mxu0 0.0
    %202 = vmatpush1.msra.mxu0 0.0
    %203 = vmatprep.subr.mxu0 0.0
    %204 = vmatpush1.msra.mxu0 0.0
    %205 = vmatprep.subr.mxu0 0.0
    %206 = vmatpush1.msra.mxu0 0.0
    %207 = vmatprep.subr.mxu0 0.0
    %208 = vmatpush1.msra.mxu0 0.0
    %209 = vmatprep.subr.mxu0 0.0
    %210 = vmatpush1.msra.mxu0 0.0
    %211 = vmatprep.subr.mxu0 0.0
    %212 = vmatpush1.msra.mxu0 0.0
    %213 = vmatprep.subr.mxu0 0.0
    %214 = vmatpush1.msra.mxu0 0.0
    %215 = vmatprep.subr.mxu0 0.0
    %216 = vmatpush1.msra.mxu0 0.0
    %217 = vmatprep.mubr.f32.mxu0 0.0
    %218 = vmatmul.mubr.f32.gmra.mrb[0].mxu0 %v71
    %v219 = vpop.f32.mrb[0].mxu0
    %v220 = vadd.f32 %v63, %v219
    %v221 = vpop.f32.mrb[0].mxu0
    %v222 = vadd.f32 %v63, %v221
    %223 = vdwg.mxu0
    %v224 = vmul.f32 %v149, 0.01
    %v225 = vmul.f32 %v151, 0.01
    %v226 = vmul.f32 %v220, 0.01
    %v227 = vmul.f32 %v222, 0.01
    %v228 = vmax.f32 %v149, %v224
    %v229 = vmax.f32 %v151, %v225
    %v230 = vmax.f32 %v220, %v226
    %v231 = vmax.f32 %v222, %v227
    %232 = vrot.lane.b32.xlu0 %v228, 17
    %v233 = vpop.permute.xlu0 %232
    %234 = vrot.lane.b32.xlu0 %v229, 17
    %v235 = vpop.permute.xlu0 %234
    %236 = vrot.lane.b32.xlu0 %v230, 17
    %v237 = vpop.permute.xlu0 %236
    %238 = vrot.lane.b32.xlu0 %v231, 17
    %v239 = vpop.permute.xlu0 %238
    %v240 = vlaneseq
    %v241 = vand.u32 %v240, 127
    %vm242 = vcmp.lt.s32.totalorder %v241, 17
    %v243 = vsel %vm242, %v237, %v239
    %v244 = vsel %vm242, %v235, %v237
    %v245 = vsel %vm242, %v233, %v235
    %v246 = vsel %vm242, %v239, %v233
    %247 = vrot.lane.b32.xlu0 %v228, 16
    %v248 = vpop.permute.xlu0 %247
    %249 = vrot.lane.b32.xlu0 %v229, 16
    %v250 = vpop.permute.xlu0 %249
    %251 = vrot.lane.b32.xlu0 %v230, 16
    %v252 = vpop.permute.xlu0 %251
    %253 = vrot.lane.b32.xlu0 %v231, 16
    %v254 = vpop.permute.xlu0 %253
    %vm255 = vcmp.lt.s32.totalorder %v241, 16
    %v256 = vsel %vm255, %v252, %v254
    %v257 = vsel %vm255, %v250, %v252
    %v258 = vsel %vm255, %v248, %v250
    %v259 = vsel %vm255, %v254, %v248
    %260 = vrot.lane.b32.xlu0 %v228, 15
    %v261 = vpop.permute.xlu0 %260
    %262 = vrot.lane.b32.xlu0 %v229, 15
    %v263 = vpop.permute.xlu0 %262
    %264 = vrot.lane.b32.xlu0 %v230, 15
    %v265 = vpop.permute.xlu0 %264
    %266 = vrot.lane.b32.xlu0 %v231, 15
    %v267 = vpop.permute.xlu0 %266
    %vm268 = vcmp.lt.s32.totalorder %v241, 15
    %v269 = vsel %vm268, %v265, %v267
    %v270 = vsel %vm268, %v263, %v265
    %v271 = vsel %vm268, %v261, %v263
    %v272 = vsel %vm268, %v267, %v261
    %273 = vrot.lane.b32.xlu0 %v228, 1
    %v274 = vpop.permute.xlu0 %273
    %275 = vrot.lane.b32.xlu0 %v229, 1
    %v276 = vpop.permute.xlu0 %275
    %277 = vrot.lane.b32.xlu0 %v230, 1
    %v278 = vpop.permute.xlu0 %277
    %279 = vrot.lane.b32.xlu0 %v231, 1
    %v280 = vpop.permute.xlu0 %279
    %vm281 = vcmp.lt.s32.totalorder %v241, 1
    %v282 = vsel %vm281, %v278, %v280
    %v283 = vsel %vm281, %v276, %v278
    %v284 = vsel %vm281, %v274, %v276
    %v285 = vsel %vm281, %v280, %v274
    %286 = vrot.lane.b32.xlu0 %v228, 127
    %v287 = vpop.permute.xlu0 %286
    %288 = vrot.lane.b32.xlu0 %v229, 127
    %v289 = vpop.permute.xlu0 %288
    %290 = vrot.lane.b32.xlu0 %v230, 127
    %v291 = vpop.permute.xlu0 %290
    %292 = vrot.lane.b32.xlu0 %v231, 127
    %v293 = vpop.permute.xlu0 %292
    %vm294 = vcmp.lt.s32.totalorder %v241, 127
    %v295 = vsel %vm294, %v291, %v293
    %v296 = vsel %vm294, %v289, %v291
    %v297 = vsel %vm294, %v287, %v289
    %v298 = vsel %vm294, %v293, %v287
    %299 = vrot.lane.b32.xlu0 %v228, 113
    %v300 = vpop.permute.xlu0 %299
    %301 = vrot.lane.b32.xlu0 %v229, 113
    %v302 = vpop.permute.xlu0 %301
    %303 = vrot.lane.b32.xlu0 %v230, 113
    %v304 = vpop.permute.xlu0 %303
    %305 = vrot.lane.b32.xlu0 %v231, 113
    %v306 = vpop.permute.xlu0 %305
    %vm307 = vcmp.lt.s32.totalorder %v241, 113
    %v308 = vsel %vm307, %v304, %v306
    %v309 = vsel %vm307, %v302, %v304
    %v310 = vsel %vm307, %v300, %v302
    %v311 = vsel %vm307, %v306, %v300
    %312 = vrot.lane.b32.xlu0 %v228, 112
    %v313 = vpop.permute.xlu0 %312
    %314 = vrot.lane.b32.xlu0 %v229, 112
    %v315 = vpop.permute.xlu0 %314
    %316 = vrot.lane.b32.xlu0 %v230, 112
    %v317 = vpop.permute.xlu0 %316
    %318 = vrot.lane.b32.xlu0 %v231, 112
    %v319 = vpop.permute.xlu0 %318
    %vm320 = vcmp.lt.s32.totalorder %v241, 112
    %v321 = vsel %vm320, %v317, %v319
    %v322 = vsel %vm320, %v315, %v317
    %v323 = vsel %vm320, %v313, %v315
    %v324 = vsel %vm320, %v319, %v313
    %325 = vrot.lane.b32.xlu0 %v228, 111
    %v326 = vpop.permute.xlu0 %325
    %327 = vrot.lane.b32.xlu0 %v229, 111
    %v328 = vpop.permute.xlu0 %327
    %329 = vrot.lane.b32.xlu0 %v230, 111
    %v330 = vpop.permute.xlu0 %329
    %331 = vrot.lane.b32.xlu0 %v231, 111
    %v332 = vpop.permute.xlu0 %331
    %vm333 = vcmp.lt.s32.totalorder %v241, 111
    %v334 = vsel %vm333, %v330, %v332
    %v335 = vsel %vm333, %v328, %v330
    %v336 = vsel %vm333, %v326, %v328
    %v337 = vsel %vm333, %v332, %v326
    %v342 = vrot.slane %v259, 4
    %v343 = vrot.slane %v258, 4
    %v344 = vrot.slane %v257, 4
    %v345 = vrot.slane %v256, 4
    %v354 = vrot.slane %v285, 4
    %v355 = vrot.slane %v284, 4
    %v356 = vrot.slane %v283, 4
    %v357 = vrot.slane %v282, 4
    %v366 = vrot.slane %v297, 4
    %v367 = vrot.slane %v296, 4
    %v368 = vrot.slane %v295, 4
    %v369 = vrot.slane %v298, 4
    %v378 = vrot.slane %v323, 4
    %v379 = vrot.slane %v322, 4
    %v380 = vrot.slane %v321, 4
    %v381 = vrot.slane %v324, 4
    %v386 = vsel %vm73, %v246, %v342
    %v387 = vsel %vm73, %v245, %v343
    %v388 = vsel %vm73, %v244, %v344
    %v389 = vsel %vm73, %v243, %v345
    %v390 = vsel %vm73, %v272, %v354
    %v391 = vsel %vm73, %v271, %v355
    %v392 = vsel %vm73, %v270, %v356
    %v393 = vsel %vm73, %v269, %v357
    %v394 = vsel %vm73, %v228, %v366
    %v395 = vsel %vm73, %v229, %v367
    %v396 = vsel %vm73, %v230, %v368
    %v397 = vsel %vm73, %v231, %v369
    %v398 = vsel %vm73, %v310, %v378
    %v399 = vsel %vm73, %v309, %v379
    %v400 = vsel %vm73, %v308, %v380
    %v401 = vsel %vm73, %v311, %v381
    %v402 = vld [vmem:[#allocation5] sm:$0xff]
    %v403 = vld [vmem:[#allocation5 + $0x8] sm:$0xff]
    %v404 = vld [vmem:[#allocation5 + $0x10] sm:$0xff]
    %v405 = vld [vmem:[#allocation5 + $0x18] sm:$0xff]
    %v406 = vld [vmem:[#allocation5 + $0x20] sm:$0xff]
    %v407 = vld [vmem:[#allocation5 + $0x28] sm:$0xff]
    %v408 = vld [vmem:[#allocation5 + $0x30] sm:$0xff]
    %v409 = vld [vmem:[#allocation5 + $0x38] sm:$0xff]
    %v410 = vld [vmem:[#allocation5 + $0x40] sm:$0xff]
    %v411 = vld [vmem:[#allocation5 + $0x48] sm:$0xff]
    %v412 = vld [vmem:[#allocation5 + $0x50] sm:$0xff]
    %v413 = vld [vmem:[#allocation5 + $0x58] sm:$0xff]
    %v414 = vld [vmem:[#allocation5 + $0x60] sm:$0xff]
    %v415 = vld [vmem:[#allocation5 + $0x68] sm:$0xff]
    %v416 = vld [vmem:[#allocation5 + $0x70] sm:$0xff]
    %v417 = vld [vmem:[#allocation5 + $0x78] sm:$0xff]
    %v418 = vld [vmem:[#allocation5 + $0x80] sm:$0xf]
    %v419 = vld [vmem:[#allocation5 + $0x88] sm:$0xf]
    %v420 = vld [vmem:[#allocation5 + $0x90] sm:$0xf]
    %v421 = vld [vmem:[#allocation5 + $0x98] sm:$0xf]
    %v422 = vmul.f32 %v386, %v402
    %v423 = vmul.f32 %v387, %v403
    %v424 = vmul.f32 %v388, %v404
    %v425 = vmul.f32 %v389, %v405
    %v426 = vmul.f32 %v390, %v406
    %v427 = vmul.f32 %v391, %v407
    %v428 = vmul.f32 %v392, %v408
    %v429 = vmul.f32 %v393, %v409
    %v430 = vmul.f32 %v394, %v410
    %v431 = vmul.f32 %v395, %v411
    %v432 = vmul.f32 %v396, %v412
    %v433 = vmul.f32 %v397, %v413
    %v434 = vmul.f32 %v398, %v414
    %v435 = vmul.f32 %v399, %v415
    %v436 = vmul.f32 %v400, %v416
    %v437 = vmul.f32 %v401, %v417
    %v438 = vmul.f32 %v336, %v418
    %v439 = vmul.f32 %v335, %v419
    %v440 = vmul.f32 %v334, %v420
    %v441 = vmul.f32 %v337, %v421
    %v442 = vld [vmem:[%s2] sm:$0xff]
    %v443 = vld [vmem:[%s5] sm:$0xff]
    %445 = vset.pattern.permute.xlu0 0
    %446 = vperm.xlu0 %445, %v443
    %v447 = vpop.permute.xlu0 %446
    %vm449 = vcmask 293888
    %v451 = vsel %vm449, %v442, 0
    %v454 = vsel %vm73, %v438, 0
    %v457 = vsel %vm73, %v439, 0
    %v460 = vsel %vm73, %v440, 0
    %v463 = vsel %vm73, %v441, 0
    %465 = vmatprep.subr.mxu0 %v423
    %466 = vmatpush1.msra.mxu0 %v422
    %467 = vmatprep.subr.mxu0 %v427
    %468 = vmatpush1.msra.mxu0 %v426
    %469 = vmatprep.subr.mxu0 %v431
    %470 = vmatpush1.msra.mxu0 %v430
    %471 = vmatprep.subr.mxu0 %v435
    %472 = vmatpush1.msra.mxu0 %v434
    %473 = vmatprep.subr.mxu0 %v457
    %474 = vmatpush1.msra.mxu0 %v454
    %475 = vmatprep.subr.mxu0 0.0
    %476 = vmatpush1.msra.mxu0 0.0
    %477 = vmatprep.subr.mxu0 0.0
    %478 = vmatpush1.msra.mxu0 0.0
    %479 = vmatprep.subr.mxu0 0.0
    %480 = vmatpush1.msra.mxu0 0.0
    %481 = vmatprep.subr.mxu0 0.0
    %482 = vmatpush1.msra.mxu0 0.0
    %483 = vmatprep.subr.mxu0 0.0
    %484 = vmatpush1.msra.mxu0 0.0
    %485 = vmatprep.subr.mxu0 0.0
    %486 = vmatpush1.msra.mxu0 0.0
    %487 = vmatprep.subr.mxu0 0.0
    %488 = vmatpush1.msra.mxu0 0.0
    %489 = vmatprep.subr.mxu0 0.0
    %490 = vmatpush1.msra.mxu0 0.0
    %491 = vmatprep.subr.mxu0 0.0
    %492 = vmatpush1.msra.mxu0 0.0
    %493 = vmatprep.subr.mxu0 0.0
    %494 = vmatpush1.msra.mxu0 0.0
    %495 = vmatprep.subr.mxu0 0.0
    %496 = vmatpush1.msra.mxu0 0.0
    %497 = vmatprep.subr.mxu0 0.0
    %498 = vmatpush1.msra.mxu0 0.0
    %499 = vmatprep.subr.mxu0 0.0
    %500 = vmatpush1.msra.mxu0 0.0
    %501 = vmatprep.subr.mxu0 0.0
    %502 = vmatpush1.msra.mxu0 0.0
    %503 = vmatprep.subr.mxu0 0.0
    %504 = vmatpush1.msra.mxu0 0.0
    %505 = vmatprep.subr.mxu0 0.0
    %506 = vmatpush1.msra.mxu0 0.0
    %507 = vmatprep.subr.mxu0 0.0
    %508 = vmatpush1.msra.mxu0 0.0
    %509 = vmatprep.subr.mxu0 0.0
    %510 = vmatpush1.msra.mxu0 0.0
    %511 = vmatprep.subr.mxu0 0.0
    %512 = vmatpush1.msra.mxu0 0.0
    %513 = vmatprep.subr.mxu0 0.0
    %514 = vmatpush1.msra.mxu0 0.0
    %515 = vmatprep.subr.mxu0 0.0
    %516 = vmatpush1.msra.mxu0 0.0
    %517 = vmatprep.subr.mxu0 0.0
    %518 = vmatpush1.msra.mxu0 0.0
    %519 = vmatprep.subr.mxu0 0.0
    %520 = vmatpush1.msra.mxu0 0.0
    %521 = vmatprep.subr.mxu0 0.0
    %522 = vmatpush1.msra.mxu0 0.0
    %523 = vmatprep.subr.mxu0 0.0
    %524 = vmatpush1.msra.mxu0 0.0
    %525 = vmatprep.subr.mxu0 0.0
    %526 = vmatpush1.msra.mxu0 0.0
    %527 = vmatprep.subr.mxu0 0.0
    %528 = vmatpush1.msra.mxu0 0.0
    %529 = vmatprep.mubr.f32.mxu0 0.0
    %530 = vmatmul.mubr.f32.gmra.mrb[0].mxu0 %v451
    %v531 = vpop.f32.mrb[0].mxu0
    %v532 = vadd.f32 %v447, %v531
    %v533 = vpop.f32.mrb[0].mxu0
    %v534 = vadd.f32 %v447, %v533
    %535 = vdwg.mxu0
    %536 = vmatprep.subr.mxu0 %v425
    %537 = vmatpush1.msra.mxu0 %v424
    %538 = vmatprep.subr.mxu0 %v429
    %539 = vmatpush1.msra.mxu0 %v428
    %540 = vmatprep.subr.mxu0 %v433
    %541 = vmatpush1.msra.mxu0 %v432
    %542 = vmatprep.subr.mxu0 %v437
    %543 = vmatpush1.msra.mxu0 %v436
    %544 = vmatprep.subr.mxu0 %v463
    %545 = vmatpush1.msra.mxu0 %v460
    %546 = vmatprep.subr.mxu0 0.0
    %547 = vmatpush1.msra.mxu0 0.0
    %548 = vmatprep.subr.mxu0 0.0
    %549 = vmatpush1.msra.mxu0 0.0
    %550 = vmatprep.subr.mxu0 0.0
    %551 = vmatpush1.msra.mxu0 0.0
    %552 = vmatprep.subr.mxu0 0.0
    %553 = vmatpush1.msra.mxu0 0.0
    %554 = vmatprep.subr.mxu0 0.0
    %555 = vmatpush1.msra.mxu0 0.0
    %556 = vmatprep.subr.mxu0 0.0
    %557 = vmatpush1.msra.mxu0 0.0
    %558 = vmatprep.subr.mxu0 0.0
    %559 = vmatpush1.msra.mxu0 0.0
    %560 = vmatprep.subr.mxu0 0.0
    %561 = vmatpush1.msra.mxu0 0.0
    %562 = vmatprep.subr.mxu0 0.0
    %563 = vmatpush1.msra.mxu0 0.0
    %564 = vmatprep.subr.mxu0 0.0
    %565 = vmatpush1.msra.mxu0 0.0
    %566 = vmatprep.subr.mxu0 0.0
    %567 = vmatpush1.msra.mxu0 0.0
    %568 = vmatprep.subr.mxu0 0.0
    %569 = vmatpush1.msra.mxu0 0.0
    %570 = vmatprep.subr.mxu0 0.0
    %571 = vmatpush1.msra.mxu0 0.0
    %572 = vmatprep.subr.mxu0 0.0
    %573 = vmatpush1.msra.mxu0 0.0
    %574 = vmatprep.subr.mxu0 0.0
    %575 = vmatpush1.msra.mxu0 0.0
    %576 = vmatprep.subr.mxu0 0.0
    %577 = vmatpush1.msra.mxu0 0.0
    %578 = vmatprep.subr.mxu0 0.0
    %579 = vmatpush1.msra.mxu0 0.0
    %580 = vmatprep.subr.mxu0 0.0
    %581 = vmatpush1.msra.mxu0 0.0
    %582 = vmatprep.subr.mxu0 0.0
    %583 = vmatpush1.msra.mxu0 0.0
    %584 = vmatprep.subr.mxu0 0.0
    %585 = vmatpush1.msra.mxu0 0.0
    %586 = vmatprep.subr.mxu0 0.0
    %587 = vmatpush1.msra.mxu0 0.0
    %588 = vmatprep.subr.mxu0 0.0
    %589 = vmatpush1.msra.mxu0 0.0
    %590 = vmatprep.subr.mxu0 0.0
    %591 = vmatpush1.msra.mxu0 0.0
    %592 = vmatprep.subr.mxu0 0.0
    %593 = vmatpush1.msra.mxu0 0.0
    %594 = vmatprep.subr.mxu0 0.0
    %595 = vmatpush1.msra.mxu0 0.0
    %596 = vmatprep.subr.mxu0 0.0
    %597 = vmatpush1.msra.mxu0 0.0
    %598 = vmatprep.subr.mxu0 0.0
    %599 = vmatpush1.msra.mxu0 0.0
    %600 = vmatprep.mubr.f32.mxu0 0.0
    %601 = vmatmul.mubr.f32.gmra.mrb[0].mxu0 %v451
    %v602 = vpop.f32.mrb[0].mxu0
    %v603 = vadd.f32 %v447, %v602
    %v604 = vpop.f32.mrb[0].mxu0
    %v605 = vadd.f32 %v447, %v604
    %606 = vdwg.mxu0
    %v607 = vmul.f32 %v532, 0.01
    %v608 = vmul.f32 %v534, 0.01
    %v609 = vmul.f32 %v603, 0.01
    %v610 = vmul.f32 %v605, 0.01
    %v611 = vmax.f32 %v532, %v607
    %v612 = vmax.f32 %v534, %v608
    %v613 = vmax.f32 %v603, %v609
    %v614 = vmax.f32 %v605, %v610
    %v615 = vld [vmem:[%s3] sm:$0xff]
    %v616 = vld [vmem:[%s6] sm:$0xff]
    %618 = vset.pattern.permute.xlu0 0
    %619 = vperm.xlu0 %618, %v616
    %v620 = vpop.permute.xlu0 %619
    %vm622 = vcmask 64512
    %v624 = vsel %vm622, %v615, 0
    %626 = vmatprep.subr.mxu0 %v612
    %627 = vmatpush1.msra.mxu0 %v611
    %628 = vmatprep.subr.mxu0 0.0
    %629 = vmatpush1.msra.mxu0 0.0
    %630 = vmatprep.subr.mxu0 0.0
    %631 = vmatpush1.msra.mxu0 0.0
    %632 = vmatprep.subr.mxu0 0.0
    %633 = vmatpush1.msra.mxu0 0.0
    %634 = vmatprep.subr.mxu0 0.0
    %635 = vmatpush1.msra.mxu0 0.0
    %636 = vmatprep.subr.mxu0 0.0
    %637 = vmatpush1.msra.mxu0 0.0
    %638 = vmatprep.subr.mxu0 0.0
    %639 = vmatpush1.msra.mxu0 0.0
    %640 = vmatprep.subr.mxu0 0.0
    %641 = vmatpush1.msra.mxu0 0.0
    %642 = vmatprep.subr.mxu0 0.0
    %643 = vmatpush1.msra.mxu0 0.0
    %644 = vmatprep.subr.mxu0 0.0
    %645 = vmatpush1.msra.mxu0 0.0
    %646 = vmatprep.subr.mxu0 0.0
    %647 = vmatpush1.msra.mxu0 0.0
    %648 = vmatprep.subr.mxu0 0.0
    %649 = vmatpush1.msra.mxu0 0.0
    %650 = vmatprep.subr.mxu0 0.0
    %651 = vmatpush1.msra.mxu0 0.0
    %652 = vmatprep.subr.mxu0 0.0
    %653 = vmatpush1.msra.mxu0 0.0
    %654 = vmatprep.subr.mxu0 0.0
    %655 = vmatpush1.msra.mxu0 0.0
    %656 = vmatprep.subr.mxu0 0.0
    %657 = vmatpush1.msra.mxu0 0.0
    %658 = vmatprep.subr.mxu0 0.0
    %659 = vmatpush1.msra.mxu0 0.0
    %660 = vmatprep.subr.mxu0 0.0
    %661 = vmatpush1.msra.mxu0 0.0
    %662 = vmatprep.subr.mxu0 0.0
    %663 = vmatpush1.msra.mxu0 0.0
    %664 = vmatprep.subr.mxu0 0.0
    %665 = vmatpush1.msra.mxu0 0.0
    %666 = vmatprep.subr.mxu0 0.0
    %667 = vmatpush1.msra.mxu0 0.0
    %668 = vmatprep.subr.mxu0 0.0
    %669 = vmatpush1.msra.mxu0 0.0
    %670 = vmatprep.subr.mxu0 0.0
    %671 = vmatpush1.msra.mxu0 0.0
    %672 = vmatprep.subr.mxu0 0.0
    %673 = vmatpush1.msra.mxu0 0.0
    %674 = vmatprep.subr.mxu0 0.0
    %675 = vmatpush1.msra.mxu0 0.0
    %676 = vmatprep.subr.mxu0 0.0
    %677 = vmatpush1.msra.mxu0 0.0
    %678 = vmatprep.subr.mxu0 0.0
    %679 = vmatpush1.msra.mxu0 0.0
    %680 = vmatprep.subr.mxu0 0.0
    %681 = vmatpush1.msra.mxu0 0.0
    %682 = vmatprep.subr.mxu0 0.0
    %683 = vmatpush1.msra.mxu0 0.0
    %684 = vmatprep.subr.mxu0 0.0
    %685 = vmatpush1.msra.mxu0 0.0
    %686 = vmatprep.subr.mxu0 0.0
    %687 = vmatpush1.msra.mxu0 0.0
    %688 = vmatprep.subr.mxu0 0.0
    %689 = vmatpush1.msra.mxu0 0.0
    %690 = vmatprep.mubr.f32.mxu0 0.0
    %691 = vmatmul.mubr.f32.gmra.mrb[0].mxu0 %v624
    %v692 = vpop.f32.mrb[0].mxu0
    %v693 = vadd.f32 %v620, %v692
    %v694 = vpop.f32.mrb[0].mxu0
    %v695 = vadd.f32 %v620, %v694
    %696 = vdwg.mxu0
    %697 = vmatprep.subr.mxu0 %v614
    %698 = vmatpush1.msra.mxu0 %v613
    %699 = vmatprep.subr.mxu0 0.0
    %700 = vmatpush1.msra.mxu0 0.0
    %701 = vmatprep.subr.mxu0 0.0
    %702 = vmatpush1.msra.mxu0 0.0
    %703 = vmatprep.subr.mxu0 0.0
    %704 = vmatpush1.msra.mxu0 0.0
    %705 = vmatprep.subr.mxu0 0.0
    %706 = vmatpush1.msra.mxu0 0.0
    %707 = vmatprep.subr.mxu0 0.0
    %708 = vmatpush1.msra.mxu0 0.0
    %709 = vmatprep.subr.mxu0 0.0
    %710 = vmatpush1.msra.mxu0 0.0
    %711 = vmatprep.subr.mxu0 0.0
    %712 = vmatpush1.msra.mxu0 0.0
    %713 = vmatprep.subr.mxu0 0.0
    %714 = vmatpush1.msra.mxu0 0.0
    %715 = vmatprep.subr.mxu0 0.0
    %716 = vmatpush1.msra.mxu0 0.0
    %717 = vmatprep.subr.mxu0 0.0
    %718 = vmatpush1.msra.mxu0 0.0
    %719 = vmatprep.subr.mxu0 0.0
    %720 = vmatpush1.msra.mxu0 0.0
    %721 = vmatprep.subr.mxu0 0.0
    %722 = vmatpush1.msra.mxu0 0.0
    %723 = vmatprep.subr.mxu0 0.0
    %724 = vmatpush1.msra.mxu0 0.0
    %725 = vmatprep.subr.mxu0 0.0
    %726 = vmatpush1.msra.mxu0 0.0
    %727 = vmatprep.subr.mxu0 0.0
    %728 = vmatpush1.msra.mxu0 0.0
    %729 = vmatprep.subr.mxu0 0.0
    %730 = vmatpush1.msra.mxu0 0.0
    %731 = vmatprep.subr.mxu0 0.0
    %732 = vmatpush1.msra.mxu0 0.0
    %733 = vmatprep.subr.mxu0 0.0
    %734 = vmatpush1.msra.mxu0 0.0
    %735 = vmatprep.subr.mxu0 0.0
    %736 = vmatpush1.msra.mxu0 0.0
    %737 = vmatprep.subr.mxu0 0.0
    %738 = vmatpush1.msra.mxu0 0.0
    %739 = vmatprep.subr.mxu0 0.0
    %740 = vmatpush1.msra.mxu0 0.0
    %741 = vmatprep.subr.mxu0 0.0
    %742 = vmatpush1.msra.mxu0 0.0
    %743 = vmatprep.subr.mxu0 0.0
    %744 = vmatpush1.msra.mxu0 0.0
    %745 = vmatprep.subr.mxu0 0.0
    %746 = vmatpush1.msra.mxu0 0.0
    %747 = vmatprep.subr.mxu0 0.0
    %748 = vmatpush1.msra.mxu0 0.0
    %749 = vmatprep.subr.mxu0 0.0
    %750 = vmatpush1.msra.mxu0 0.0
    %751 = vmatprep.subr.mxu0 0.0
    %752 = vmatpush1.msra.mxu0 0.0
    %753 = vmatprep.subr.mxu0 0.0
    %754 = vmatpush1.msra.mxu0 0.0
    %755 = vmatprep.subr.mxu0 0.0
    %756 = vmatpush1.msra.mxu0 0.0
    %757 = vmatprep.subr.mxu0 0.0
    %758 = vmatpush1.msra.mxu0 0.0
    %759 = vmatprep.subr.mxu0 0.0
    %760 = vmatpush1.msra.mxu0 0.0
    %761 = vmatprep.mubr.f32.mxu0 0.0
    %762 = vmatmul.mubr.f32.gmra.mrb[0].mxu0 %v624
    %v763 = vpop.f32.mrb[0].mxu0
    %v764 = vadd.f32 %v620, %v763
    %v765 = vpop.f32.mrb[0].mxu0
    %v766 = vadd.f32 %v620, %v765
    %767 = vdwg.mxu0
    %v768 = vmul.f32 %v693, 0.01
    %v769 = vmul.f32 %v695, 0.01
    %v770 = vmul.f32 %v764, 0.01
    %v771 = vmul.f32 %v766, 0.01
    %v772 = vmax.f32 %v693, %v768
    %v773 = vmax.f32 %v695, %v769
    %v774 = vmax.f32 %v764, %v770
    %v775 = vmax.f32 %v766, %v771
    %776 = vst [vmem:[#allocation7] sm:$0xff] %v772
    %777 = vst [vmem:[#allocation7 + $0x8] sm:$0xff] %v773
    %778 = vst [vmem:[#allocation7 + $0x10] sm:$0xff] %v774
    %779 = vst [vmem:[#allocation7 + $0x18] sm:$0xff] %v775
    // Predicated region
    $region42: #{tpu_custom_call.1} parent=1 // pred_check
      _
    $region43: #{tpu_custom_call.1} parent=1 // pred_check_branch
      %781 = sbr.rel (0) target = $region45
    $region44: #{tpu_custom_call.1} parent=1 // pred_region
      %s783 = ssub.s32 512, 512
      %784 = vsyncadd [#allocation4], %s783
      %s786 = sshll.u32 [#allocation7], 4
      %s787 = int_to_ptr.vmem [resolvable:$true] %s786
      %789 = dma.vmem_to_hbm [thread:$0]  %s787, 512, %s8, [#allocation4]
    $region45: #{tpu_custom_call.1} parent=1 // pred_fallthru
      _
    // Predicated region
    $region46: #{tpu_custom_call.1} parent=1 // pred_check
      _
    $region47: #{tpu_custom_call.1} parent=1 // pred_check_branch
      %791 = sbr.rel (0) target = $region49
    $region48: #{tpu_custom_call.1} parent=1 // pred_region
      %792 = dma.done [#allocation4], 512
    $region49: #{tpu_custom_call.1} parent=1 // pred_fallthru
      _
    %793 = vsyncpa [#allocation3], 1
    %794 = vsyncpa [#allocation6], 1
    %795 = vsyncpa [#allocation4], 1

</llo_original>
